<compile_context>
chip_gen: v7x
topology: tpu7x:2x2x1
jax: 0.10.0
libtpu: 0.0.40
codegen_flags: <defaults>
</compile_context>

<pallas_src>
import math
from functools import partial

import jax
import jax.numpy as jnp
from jax import lax
from jax.experimental import pallas as pl
from jax.experimental.pallas import tpu as pltpu


def _round_up(x, m):
    return (x + m - 1) // m * m


def _gelu_exact(x):
    # nn.GELU() default = exact erf formulation
    return 0.5 * x * (1.0 + lax.erf(x / jnp.sqrt(2.0).astype(x.dtype)))


def _igpt_kernel(f1_ref,
                 wq_ref, bq_ref, wk_ref, bk_ref, wv_ref, bv_ref,
                 wo_ref, bo_ref,
                 w1_ref, b1_ref, w2_ref, b2_ref, w3_ref, b3_ref,
                 out_ref,
                 *, n_heads):
    Bb, S, D = f1_ref.shape
    hd = D // n_heads
    T = Bb * S
    scale = jnp.float32(1.0 / math.sqrt(hd))
    bf16 = jnp.bfloat16

    # ---- loop-invariant prep (once per batch block) ------------------------
    # NOTE: the (Bb,S,D)->(T,D) reshape is layout-free when S % 8 == 0 (f32).
    x32 = f1_ref[...].reshape(T, D)              # f32, kept for the residual
    xb = x32.astype(bf16)                        # single cast, reused by Q/K/V

    # Full-width projections: (T,D)@(D,D); N = D lanes -> full MXU width.
    q = (jnp.dot(xb, wq_ref[...], preferred_element_type=jnp.float32)
         + bq_ref[...]) * scale                  # scale folded into q (T,D)
    k = jnp.dot(xb, wk_ref[...], preferred_element_type=jnp.float32) + bk_ref[...]
    v = jnp.dot(xb, wv_ref[...], preferred_element_type=jnp.float32) + bv_ref[...]
    qb = q.astype(bf16)
    kb = k.astype(bf16)
    vb = v.astype(bf16)

    # Causal mask as an additive bias, built once (not per head).
    row = lax.broadcasted_iota(jnp.int32, (S, S), 0)
    col = lax.broadcasted_iota(jnp.int32, (S, S), 1)
    mask_bias = jnp.where(row >= col, jnp.float32(0.0), jnp.float32(-1e30))

    wo = wo_ref[...]                             # (D, D) bf16

    # ---- per-head attention (static loop, heads share this grid step) ------
    # TODO(synk): for large S add a KV-tile grid axis (flash-style online
    # softmax) instead of materializing the full (Bb,S,S) score tensor.
    f2 = jnp.zeros((T, D), jnp.float32)
    for h in range(n_heads):
        lo, hi = h * hd, (h + 1) * hd
        qh = qb[:, lo:hi].reshape(Bb, S, hd)
        kh = kb[:, lo:hi].reshape(Bb, S, hd)
        vh = vb[:, lo:hi].reshape(Bb, S, hd)

        scores = jnp.einsum("bqd,bkd->bqk", qh, kh,
                            preferred_element_type=jnp.float32)
        scores = scores + mask_bias[None]
        m = jnp.max(scores, axis=-1, keepdims=True)
        # TODO(synk): on v6e/v7x compute p in bf16 (bf16 EUP/VPU); keep f32 on v5e.
        p = jnp.exp(scores - m)
        denom = jnp.sum(p, axis=-1, keepdims=True)
        p = p * pl.reciprocal(denom, approx=True)

        attn = jnp.einsum("bqk,bkd->bqd", p.astype(bf16), vh,
                          preferred_element_type=jnp.float32)
        # concat(heads) @ Wo == sum_h attn_h @ Wo[h*hd:(h+1)*hd, :]
        f2 = f2 + jnp.dot(attn.reshape(T, hd).astype(bf16), wo[lo:hi, :],
                          preferred_element_type=jnp.float32)

    # ---- residual + MLP head -----------------------------------------------
    h0 = x32 + f2 + bo_ref[...]
    h1 = _gelu_exact(jnp.dot(h0.astype(bf16), w1_ref[...],
                             preferred_element_type=jnp.float32) + b1_ref[...])
    h2 = _gelu_exact(jnp.dot(h1.astype(bf16), w2_ref[...],
                             preferred_element_type=jnp.float32) + b2_ref[...])
    # TODO(synk): when the vocab is large, tile this matmul over vocab blocks
    # (extra grid axis / second pallas_call) so w3 and the f32 logits tile are
    # not resident in VMEM all at once (matters on v7x's 64 MiB).
    logits = jnp.dot(h2.astype(bf16), w3_ref[...],
                     preferred_element_type=jnp.float32) + b3_ref[...]
    out_ref[...] = logits.reshape(Bb, S, out_ref.shape[2])


def igpt_forward(x, params, *, n_heads, block_b=None,
                 vmem_limit_bytes=48 * 1024 * 1024):
    """x: (B, S) int32 token ids. Returns logits (B, S, vocab) in float32."""
    tok_emb = params["tok_emb"]          # (V, D)
    pos_emb = params["pos_emb"]          # (max_seq, D)
    B, S = x.shape
    V, D = tok_emb.shape
    assert D % n_heads == 0
    Vp = _round_up(V, 128)               # lane-dense logits store

    if block_b is None:
        # Default: >= 2 batch blocks so the "parallel" grid axis can be
        # sharded across both TensorCores on v7x (single-TC gens unaffected).
        block_b = B
        if B > 1:
            for cand in range(B // 2, 0, -1):
                if B % cand == 0:
                    block_b = cand
                    break
    assert B % block_b == 0
    nb = B // block_b

    # --- glue: embedding gather + positional add (plain JAX) ---------------
    # TODO(synk): fuse this gather into the kernel (scalar-prefetch the ids)
    # to avoid the (B, S, D) f32 HBM round trip at scale.
    f1 = jnp.take(tok_emb, x, axis=0) + pos_emb[:S][None, :, :]

    bf16 = jnp.bfloat16
    wq = params["wq"].astype(bf16); bq = params["bq"]
    wk = params["wk"].astype(bf16); bk = params["bk"]
    wv = params["wv"].astype(bf16); bv = params["bv"]
    wo = params["wo"].astype(bf16); bo = params["bo"]
    w1 = params["w1"].astype(bf16); b1 = params["b1"]
    w2 = params["w2"].astype(bf16); b2 = params["b2"]
    w3 = jnp.pad(params["w3"], ((0, 0), (0, Vp - V))).astype(bf16)  # (Dh,Vp)
    b3 = jnp.pad(params["b3"], ((0, 0), (0, Vp - V)))               # (1,Vp)

    def const_spec(a):
        nd = a.ndim
        return pl.BlockSpec(a.shape, lambda b, _nd=nd: (0,) * _nd)

    in_specs = [
        pl.BlockSpec((block_b, S, D), lambda b: (b, 0, 0)),     # f1
        const_spec(wq), const_spec(bq),
        const_spec(wk), const_spec(bk),
        const_spec(wv), const_spec(bv),
        const_spec(wo), const_spec(bo),
        const_spec(w1), const_spec(b1),
        const_spec(w2), const_spec(b2),
        const_spec(w3), const_spec(b3),
    ]

    out = pl.pallas_call(
        partial(_igpt_kernel, n_heads=n_heads),
        out_shape=jax.ShapeDtypeStruct((B, S, Vp), jnp.float32),
        grid=(nb,),
        in_specs=in_specs,
        out_specs=pl.BlockSpec((block_b, S, Vp), lambda b: (b, 0, 0)),
        compiler_params=pltpu.CompilerParams(
            dimension_semantics=("parallel",),
            vmem_limit_bytes=vmem_limit_bytes),
    )(f1, wq, bq, wk, bk, wv, bv, wo, bo, w1, b1, w2, b2, w3, b3)

    return out[:, :, :V]


def igpt_reference(x, params, *, n_heads):
    """Pure-JAX f32 reference for correctness checking."""
    tok_emb = params["tok_emb"]
    pos_emb = params["pos_emb"]
    B, S = x.shape
    V, D = tok_emb.shape
    hd = D // n_heads
    f1 = jnp.take(tok_emb, x, axis=0) + pos_emb[:S][None, :, :]
    q = f1 @ params["wq"] + params["bq"]
    k = f1 @ params["wk"] + params["bk"]
    v = f1 @ params["wv"] + params["bv"]

    def heads(t):
        return t.reshape(B, S, n_heads, hd).transpose(0, 2, 1, 3)

    qh, kh, vh = heads(q), heads(k), heads(v)
    scores = jnp.einsum("bhqd,bhkd->bhqk", qh, kh) / math.sqrt(hd)
    mask = jnp.tril(jnp.ones((S, S), bool))
    scores = jnp.where(mask[None, None], scores, -1e30)
    p = jax.nn.softmax(scores, axis=-1)
    attn = jnp.einsum("bhqk,bhkd->bhqd", p, vh)
    attn = attn.transpose(0, 2, 1, 3).reshape(B, S, D)
    f2 = attn @ params["wo"] + params["bo"]
    h0 = f1 + f2
    h1 = _gelu_exact(h0 @ params["w1"] + params["b1"])
    h2 = _gelu_exact(h1 @ params["w2"] + params["b2"])
    return h2 @ params["w3"] + params["b3"]


def init_params(key, vocab_size, max_seq, embed_dim, exp=2):
    ks = jax.random.split(key, 10)
    s = 0.02
    f32 = jnp.float32
    hidden = embed_dim * exp
    return {
        "tok_emb": s * jax.random.normal(ks[0], (vocab_size, embed_dim), f32),
        "pos_emb": s * jax.random.normal(ks[1], (max_seq, embed_dim), f32),
        "wq": s * jax.random.normal(ks[2], (embed_dim, embed_dim), f32),
        "wk": s * jax.random.normal(ks[3], (embed_dim, embed_dim), f32),
        "wv": s * jax.random.normal(ks[4], (embed_dim, embed_dim), f32),
        "wo": s * jax.random.normal(ks[5], (embed_dim, embed_dim), f32),
        "w1": s * jax.random.normal(ks[6], (embed_dim, hidden), f32),
        "w2": s * jax.random.normal(ks[7], (hidden, hidden), f32),
        "w3": s * jax.random.normal(ks[8], (hidden, vocab_size), f32),
        "bq": jnp.zeros((1, embed_dim), f32),
        "bk": jnp.zeros((1, embed_dim), f32),
        "bv": jnp.zeros((1, embed_dim), f32),
        "bo": jnp.zeros((1, embed_dim), f32),
        "b1": jnp.zeros((1, hidden), f32),
        "b2": jnp.zeros((1, hidden), f32),
        "b3": jnp.zeros((1, vocab_size), f32),
    }


if __name__ == "__main__":
    # Small shapes consistent with the module (embed_dim=128 is the module's
    # default and keeps the lane dimension dense).
    batch = 2
    seq = 8
    vocab_size = 16
    max_seq = 8
    embed_dim = 128
    n_heads = 4

    key = jax.random.PRNGKey(0)
    pkey, xkey = jax.random.split(key)
    params = init_params(pkey, vocab_size, max_seq, embed_dim)
    x = jax.random.randint(xkey, (batch, seq), 0, vocab_size, dtype=jnp.int32)

    logits = igpt_forward(x, params, n_heads=n_heads)
    jax.block_until_ready(logits)

    assert logits.shape == (batch, seq, vocab_size)
    assert jnp.all(jnp.isfinite(logits))

    ref = igpt_reference(x, params, n_heads=n_heads)
    max_err = float(jnp.max(jnp.abs(logits - ref)))
    # bf16 weights + approx reciprocal vs f32 reference -> loose tolerance.
    assert max_err < 2e-3, f"max abs err {max_err}"
    print("KERNEL_OK")
</pallas_src>

<mosaic_0001>
module attributes {stable_mosaic.version = 11 : i64} {
  func.func @_igpt_kernel(%arg0: i32, %arg1: memref<1x8x128xf32, #tpu.memory_space<vmem>>, %arg2: memref<128x128xbf16, #tpu.memory_space<vmem>>, %arg3: memref<1x128xf32, #tpu.memory_space<vmem>>, %arg4: memref<128x128xbf16, #tpu.memory_space<vmem>>, %arg5: memref<1x128xf32, #tpu.memory_space<vmem>>, %arg6: memref<128x128xbf16, #tpu.memory_space<vmem>>, %arg7: memref<1x128xf32, #tpu.memory_space<vmem>>, %arg8: memref<128x128xbf16, #tpu.memory_space<vmem>>, %arg9: memref<1x128xf32, #tpu.memory_space<vmem>>, %arg10: memref<128x256xbf16, #tpu.memory_space<vmem>>, %arg11: memref<1x256xf32, #tpu.memory_space<vmem>>, %arg12: memref<256x256xbf16, #tpu.memory_space<vmem>>, %arg13: memref<1x256xf32, #tpu.memory_space<vmem>>, %arg14: memref<256x128xbf16, #tpu.memory_space<vmem>>, %arg15: memref<1x128xf32, #tpu.memory_space<vmem>>, %arg16: memref<1x8x128xf32, #tpu.memory_space<vmem>>) attributes {dimension_semantics = [#tpu.dimension_semantics<parallel>], iteration_bounds = array<i64: 2>, scalar_prefetch = 0 : i64, scratch_operands = 0 : i64, tpu.core_type = #tpu.core_type<tc>, window_params = [{transform_indices = @transform_0, window_bounds = array<i64: 1, 8, 128>}, {pipeline_mode = #tpu.pipeline_mode<synchronous>, transform_indices = @transform_1, window_bounds = array<i64: 128, 128>}, {pipeline_mode = #tpu.pipeline_mode<synchronous>, transform_indices = @transform_2, window_bounds = array<i64: 1, 128>}, {pipeline_mode = #tpu.pipeline_mode<synchronous>, transform_indices = @transform_3, window_bounds = array<i64: 128, 128>}, {pipeline_mode = #tpu.pipeline_mode<synchronous>, transform_indices = @transform_4, window_bounds = array<i64: 1, 128>}, {pipeline_mode = #tpu.pipeline_mode<synchronous>, transform_indices = @transform_5, window_bounds = array<i64: 128, 128>}, {pipeline_mode = #tpu.pipeline_mode<synchronous>, transform_indices = @transform_6, window_bounds = array<i64: 1, 128>}, {pipeline_mode = #tpu.pipeline_mode<synchronous>, transform_indices = @transform_7, window_bounds = array<i64: 128, 128>}, {pipeline_mode = #tpu.pipeline_mode<synchronous>, transform_indices = @transform_8, window_bounds = array<i64: 1, 128>}, {pipeline_mode = #tpu.pipeline_mode<synchronous>, transform_indices = @transform_9, window_bounds = array<i64: 128, 256>}, {pipeline_mode = #tpu.pipeline_mode<synchronous>, transform_indices = @transform_10, window_bounds = array<i64: 1, 256>}, {pipeline_mode = #tpu.pipeline_mode<synchronous>, transform_indices = @transform_11, window_bounds = array<i64: 256, 256>}, {pipeline_mode = #tpu.pipeline_mode<synchronous>, transform_indices = @transform_12, window_bounds = array<i64: 1, 256>}, {pipeline_mode = #tpu.pipeline_mode<synchronous>, transform_indices = @transform_13, window_bounds = array<i64: 256, 128>}, {pipeline_mode = #tpu.pipeline_mode<synchronous>, transform_indices = @transform_14, window_bounds = array<i64: 1, 128>}, {transform_indices = @transform_15, window_bounds = array<i64: 1, 8, 128>}]} {
    %c0 = arith.constant 0 : index
    %c0_0 = arith.constant 0 : index
    %c0_1 = arith.constant 0 : index
    %0 = vector.load %arg1[%c0, %c0_0, %c0_1] : memref<1x8x128xf32, #tpu.memory_space<vmem>>, vector<1x8x128xf32>
    %1 = vector.shape_cast %0 : vector<1x8x128xf32> to vector<8x128xf32>
    %2 = arith.truncf %1 : vector<8x128xf32> to vector<8x128xbf16>
    %c0_2 = arith.constant 0 : index
    %c0_3 = arith.constant 0 : index
    %3 = vector.load %arg2[%c0_2, %c0_3] : memref<128x128xbf16, #tpu.memory_space<vmem>>, vector<128x128xbf16>
    %cst = arith.constant dense<0.000000e+00> : vector<8x128xf32>
    %4 = tpu.matmul %2, %3, %cst {dimension_numbers = #tpu.dot_dimension_numbers<[1], [0], [0], [1], [0, 0, 1, 1], [], []>} : vector<8x128xbf16>, vector<128x128xbf16>, vector<8x128xf32> -> vector<8x128xf32>
    %c0_4 = arith.constant 0 : index
    %c0_5 = arith.constant 0 : index
    %5 = vector.load %arg3[%c0_4, %c0_5] : memref<1x128xf32, #tpu.memory_space<vmem>>, vector<1x128xf32>
    %6 = vector.broadcast %5 : vector<1x128xf32> to vector<8x128xf32>
    %7 = arith.addf %4, %6 : vector<8x128xf32>
    %cst_6 = arith.constant 0.176776692 : f32
    %8 = vector.broadcast %cst_6 : f32 to vector<8x128xf32>
    %9 = arith.mulf %7, %8 : vector<8x128xf32>
    %c0_7 = arith.constant 0 : index
    %c0_8 = arith.constant 0 : index
    %10 = vector.load %arg4[%c0_7, %c0_8] : memref<128x128xbf16, #tpu.memory_space<vmem>>, vector<128x128xbf16>
    %cst_9 = arith.constant dense<0.000000e+00> : vector<8x128xf32>
    %11 = tpu.matmul %2, %10, %cst_9 {dimension_numbers = #tpu.dot_dimension_numbers<[1], [0], [0], [1], [0, 0, 1, 1], [], []>} : vector<8x128xbf16>, vector<128x128xbf16>, vector<8x128xf32> -> vector<8x128xf32>
    %c0_10 = arith.constant 0 : index
    %c0_11 = arith.constant 0 : index
    %12 = vector.load %arg5[%c0_10, %c0_11] : memref<1x128xf32, #tpu.memory_space<vmem>>, vector<1x128xf32>
    %13 = vector.broadcast %12 : vector<1x128xf32> to vector<8x128xf32>
    %14 = arith.addf %11, %13 : vector<8x128xf32>
    %c0_12 = arith.constant 0 : index
    %c0_13 = arith.constant 0 : index
    %15 = vector.load %arg6[%c0_12, %c0_13] : memref<128x128xbf16, #tpu.memory_space<vmem>>, vector<128x128xbf16>
    %cst_14 = arith.constant dense<0.000000e+00> : vector<8x128xf32>
    %16 = tpu.matmul %2, %15, %cst_14 {dimension_numbers = #tpu.dot_dimension_numbers<[1], [0], [0], [1], [0, 0, 1, 1], [], []>} : vector<8x128xbf16>, vector<128x128xbf16>, vector<8x128xf32> -> vector<8x128xf32>
    %c0_15 = arith.constant 0 : index
    %c0_16 = arith.constant 0 : index
    %17 = vector.load %arg7[%c0_15, %c0_16] : memref<1x128xf32, #tpu.memory_space<vmem>>, vector<1x128xf32>
    %18 = vector.broadcast %17 : vector<1x128xf32> to vector<8x128xf32>
    %19 = arith.addf %16, %18 : vector<8x128xf32>
    %20 = arith.truncf %9 : vector<8x128xf32> to vector<8x128xbf16>
    %21 = arith.truncf %14 : vector<8x128xf32> to vector<8x128xbf16>
    %22 = arith.truncf %19 : vector<8x128xf32> to vector<8x128xbf16>
    %23 = tpu.iota {dimensions = array<i32: 0>} : vector<8x8xi32>
    %24 = tpu.iota {dimensions = array<i32: 1>} : vector<8x8xi32>
    %25 = arith.cmpi sge, %23, %24 : vector<8x8xi32>
    %cst_17 = arith.constant 0.000000e+00 : f32
    %cst_18 = arith.constant -1.000000e+30 : f32
    %26 = vector.broadcast %cst_17 : f32 to vector<8x8xf32>
    %27 = vector.broadcast %cst_18 : f32 to vector<8x8xf32>
    %28 = arith.select %25, %26, %27 : vector<8x8xi1>, vector<8x8xf32>
    %c0_19 = arith.constant 0 : index
    %c0_20 = arith.constant 0 : index
    %29 = vector.load %arg8[%c0_19, %c0_20] : memref<128x128xbf16, #tpu.memory_space<vmem>>, vector<128x128xbf16>
    %cst_21 = arith.constant 0.000000e+00 : f32
    %30 = vector.broadcast %cst_21 : f32 to vector<8x128xf32>
    %31 = vector.extract_strided_slice %20 {offsets = [0, 0], sizes = [8, 32], strides = [1, 1]} : vector<8x128xbf16> to vector<8x32xbf16>
    %32 = vector.shape_cast %31 : vector<8x32xbf16> to vector<1x8x32xbf16>
    %33 = vector.extract_strided_slice %21 {offsets = [0, 0], sizes = [8, 32], strides = [1, 1]} : vector<8x128xbf16> to vector<8x32xbf16>
    %34 = vector.shape_cast %33 : vector<8x32xbf16> to vector<1x8x32xbf16>
    %35 = vector.extract_strided_slice %22 {offsets = [0, 0], sizes = [8, 32], strides = [1, 1]} : vector<8x128xbf16> to vector<8x32xbf16>
    %36 = vector.shape_cast %35 : vector<8x32xbf16> to vector<1x8x32xbf16>
    "tpu.trace_start"() <{level = 10 : i32, message = "bqd,bkd->bqk"}> : () -> ()
    %cst_22 = arith.constant dense<0.000000e+00> : vector<1x8x8xf32>
    %37 = tpu.matmul %32, %34, %cst_22 {dimension_numbers = #tpu.dot_dimension_numbers<[2], [2], [1], [1], [0, 0, 0, 1, 1, 1], [0], [0]>} : vector<1x8x32xbf16>, vector<1x8x32xbf16>, vector<1x8x8xf32> -> vector<1x8x8xf32>
    "tpu.trace_stop"() : () -> ()
    %38 = vector.shape_cast %28 : vector<8x8xf32> to vector<1x8x8xf32>
    %39 = arith.addf %37, %38 : vector<1x8x8xf32>
    %cst_23 = arith.constant dense<0xFF800000> : vector<1x8xf32>
    %40 = vector.multi_reduction <maximumf>, %39, %cst_23 [2] : vector<1x8x8xf32> to vector<1x8xf32>
    %41 = vector.shape_cast %40 : vector<1x8xf32> to vector<1x8x1xf32>
    %42 = vector.broadcast %41 : vector<1x8x1xf32> to vector<1x8x8xf32>
    %43 = arith.subf %39, %42 : vector<1x8x8xf32>
    %44 = math.exp %43 : vector<1x8x8xf32>
    %cst_24 = arith.constant dense<0.000000e+00> : vector<1x8xf32>
    %45 = vector.multi_reduction <add>, %44, %cst_24 [2] : vector<1x8x8xf32> to vector<1x8xf32>
    %46 = vector.shape_cast %45 : vector<1x8xf32> to vector<1x8x1xf32>
    %47 = tpu.reciprocal %46 {approx = true} : vector<1x8x1xf32> -> vector<1x8x1xf32>
    %48 = vector.broadcast %47 : vector<1x8x1xf32> to vector<1x8x8xf32>
    %49 = arith.mulf %44, %48 : vector<1x8x8xf32>
    %50 = arith.truncf %49 : vector<1x8x8xf32> to vector<1x8x8xbf16>
    "tpu.trace_start"() <{level = 10 : i32, message = "bqk,bkd->bqd"}> : () -> ()
    %cst_25 = arith.constant dense<0.000000e+00> : vector<1x8x32xf32>
    %51 = tpu.matmul %50, %36, %cst_25 {dimension_numbers = #tpu.dot_dimension_numbers<[2], [1], [1], [2], [0, 0, 0, 1, 1, 2], [0], [0]>} : vector<1x8x8xbf16>, vector<1x8x32xbf16>, vector<1x8x32xf32> -> vector<1x8x32xf32>
    "tpu.trace_stop"() : () -> ()
    %52 = vector.shape_cast %51 : vector<1x8x32xf32> to vector<8x32xf32>
    %53 = arith.truncf %52 : vector<8x32xf32> to vector<8x32xbf16>
    %54 = vector.extract_strided_slice %29 {offsets = [0, 0], sizes = [32, 128], strides = [1, 1]} : vector<128x128xbf16> to vector<32x128xbf16>
    %cst_26 = arith.constant dense<0.000000e+00> : vector<8x128xf32>
    %55 = tpu.matmul %53, %54, %cst_26 {dimension_numbers = #tpu.dot_dimension_numbers<[1], [0], [0], [1], [0, 0, 1, 1], [], []>} : vector<8x32xbf16>, vector<32x128xbf16>, vector<8x128xf32> -> vector<8x128xf32>
    %56 = arith.addf %30, %55 : vector<8x128xf32>
    %57 = vector.extract_strided_slice %20 {offsets = [0, 32], sizes = [8, 32], strides = [1, 1]} : vector<8x128xbf16> to vector<8x32xbf16>
    %58 = vector.shape_cast %57 : vector<8x32xbf16> to vector<1x8x32xbf16>
    %59 = vector.extract_strided_slice %21 {offsets = [0, 32], sizes = [8, 32], strides = [1, 1]} : vector<8x128xbf16> to vector<8x32xbf16>
    %60 = vector.shape_cast %59 : vector<8x32xbf16> to vector<1x8x32xbf16>
    %61 = vector.extract_strided_slice %22 {offsets = [0, 32], sizes = [8, 32], strides = [1, 1]} : vector<8x128xbf16> to vector<8x32xbf16>
    %62 = vector.shape_cast %61 : vector<8x32xbf16> to vector<1x8x32xbf16>
    "tpu.trace_start"() <{level = 10 : i32, message = "bqd,bkd->bqk"}> : () -> ()
    %cst_27 = arith.constant dense<0.000000e+00> : vector<1x8x8xf32>
    %63 = tpu.matmul %58, %60, %cst_27 {dimension_numbers = #tpu.dot_dimension_numbers<[2], [2], [1], [1], [0, 0, 0, 1, 1, 1], [0], [0]>} : vector<1x8x32xbf16>, vector<1x8x32xbf16>, vector<1x8x8xf32> -> vector<1x8x8xf32>
    "tpu.trace_stop"() : () -> ()
    %64 = vector.shape_cast %28 : vector<8x8xf32> to vector<1x8x8xf32>
    %65 = arith.addf %63, %64 : vector<1x8x8xf32>
    %cst_28 = arith.constant dense<0xFF800000> : vector<1x8xf32>
    %66 = vector.multi_reduction <maximumf>, %65, %cst_28 [2] : vector<1x8x8xf32> to vector<1x8xf32>
    %67 = vector.shape_cast %66 : vector<1x8xf32> to vector<1x8x1xf32>
    %68 = vector.broadcast %67 : vector<1x8x1xf32> to vector<1x8x8xf32>
    %69 = arith.subf %65, %68 : vector<1x8x8xf32>
    %70 = math.exp %69 : vector<1x8x8xf32>
    %cst_29 = arith.constant dense<0.000000e+00> : vector<1x8xf32>
    %71 = vector.multi_reduction <add>, %70, %cst_29 [2] : vector<1x8x8xf32> to vector<1x8xf32>
    %72 = vector.shape_cast %71 : vector<1x8xf32> to vector<1x8x1xf32>
    %73 = tpu.reciprocal %72 {approx = true} : vector<1x8x1xf32> -> vector<1x8x1xf32>
    %74 = vector.broadcast %73 : vector<1x8x1xf32> to vector<1x8x8xf32>
    %75 = arith.mulf %70, %74 : vector<1x8x8xf32>
    %76 = arith.truncf %75 : vector<1x8x8xf32> to vector<1x8x8xbf16>
    "tpu.trace_start"() <{level = 10 : i32, message = "bqk,bkd->bqd"}> : () -> ()
    %cst_30 = arith.constant dense<0.000000e+00> : vector<1x8x32xf32>
    %77 = tpu.matmul %76, %62, %cst_30 {dimension_numbers = #tpu.dot_dimension_numbers<[2], [1], [1], [2], [0, 0, 0, 1, 1, 2], [0], [0]>} : vector<1x8x8xbf16>, vector<1x8x32xbf16>, vector<1x8x32xf32> -> vector<1x8x32xf32>
    "tpu.trace_stop"() : () -> ()
    %78 = vector.shape_cast %77 : vector<1x8x32xf32> to vector<8x32xf32>
    %79 = arith.truncf %78 : vector<8x32xf32> to vector<8x32xbf16>
    %80 = vector.extract_strided_slice %29 {offsets = [32, 0], sizes = [32, 128], strides = [1, 1]} : vector<128x128xbf16> to vector<32x128xbf16>
    %cst_31 = arith.constant dense<0.000000e+00> : vector<8x128xf32>
    %81 = tpu.matmul %79, %80, %cst_31 {dimension_numbers = #tpu.dot_dimension_numbers<[1], [0], [0], [1], [0, 0, 1, 1], [], []>} : vector<8x32xbf16>, vector<32x128xbf16>, vector<8x128xf32> -> vector<8x128xf32>
    %82 = arith.addf %56, %81 : vector<8x128xf32>
    %83 = vector.extract_strided_slice %20 {offsets = [0, 64], sizes = [8, 32], strides = [1, 1]} : vector<8x128xbf16> to vector<8x32xbf16>
    %84 = vector.shape_cast %83 : vector<8x32xbf16> to vector<1x8x32xbf16>
    %85 = vector.extract_strided_slice %21 {offsets = [0, 64], sizes = [8, 32], strides = [1, 1]} : vector<8x128xbf16> to vector<8x32xbf16>
    %86 = vector.shape_cast %85 : vector<8x32xbf16> to vector<1x8x32xbf16>
    %87 = vector.extract_strided_slice %22 {offsets = [0, 64], sizes = [8, 32], strides = [1, 1]} : vector<8x128xbf16> to vector<8x32xbf16>
    %88 = vector.shape_cast %87 : vector<8x32xbf16> to vector<1x8x32xbf16>
    "tpu.trace_start"() <{level = 10 : i32, message = "bqd,bkd->bqk"}> : () -> ()
    %cst_32 = arith.constant dense<0.000000e+00> : vector<1x8x8xf32>
    %89 = tpu.matmul %84, %86, %cst_32 {dimension_numbers = #tpu.dot_dimension_numbers<[2], [2], [1], [1], [0, 0, 0, 1, 1, 1], [0], [0]>} : vector<1x8x32xbf16>, vector<1x8x32xbf16>, vector<1x8x8xf32> -> vector<1x8x8xf32>
    "tpu.trace_stop"() : () -> ()
    %90 = vector.shape_cast %28 : vector<8x8xf32> to vector<1x8x8xf32>
    %91 = arith.addf %89, %90 : vector<1x8x8xf32>
    %cst_33 = arith.constant dense<0xFF800000> : vector<1x8xf32>
    %92 = vector.multi_reduction <maximumf>, %91, %cst_33 [2] : vector<1x8x8xf32> to vector<1x8xf32>
    %93 = vector.shape_cast %92 : vector<1x8xf32> to vector<1x8x1xf32>
    %94 = vector.broadcast %93 : vector<1x8x1xf32> to vector<1x8x8xf32>
    %95 = arith.subf %91, %94 : vector<1x8x8xf32>
    %96 = math.exp %95 : vector<1x8x8xf32>
    %cst_34 = arith.constant dense<0.000000e+00> : vector<1x8xf32>
    %97 = vector.multi_reduction <add>, %96, %cst_34 [2] : vector<1x8x8xf32> to vector<1x8xf32>
    %98 = vector.shape_cast %97 : vector<1x8xf32> to vector<1x8x1xf32>
    %99 = tpu.reciprocal %98 {approx = true} : vector<1x8x1xf32> -> vector<1x8x1xf32>
    %100 = vector.broadcast %99 : vector<1x8x1xf32> to vector<1x8x8xf32>
    %101 = arith.mulf %96, %100 : vector<1x8x8xf32>
    %102 = arith.truncf %101 : vector<1x8x8xf32> to vector<1x8x8xbf16>
    "tpu.trace_start"() <{level = 10 : i32, message = "bqk,bkd->bqd"}> : () -> ()
    %cst_35 = arith.constant dense<0.000000e+00> : vector<1x8x32xf32>
    %103 = tpu.matmul %102, %88, %cst_35 {dimension_numbers = #tpu.dot_dimension_numbers<[2], [1], [1], [2], [0, 0, 0, 1, 1, 2], [0], [0]>} : vector<1x8x8xbf16>, vector<1x8x32xbf16>, vector<1x8x32xf32> -> vector<1x8x32xf32>
    "tpu.trace_stop"() : () -> ()
    %104 = vector.shape_cast %103 : vector<1x8x32xf32> to vector<8x32xf32>
    %105 = arith.truncf %104 : vector<8x32xf32> to vector<8x32xbf16>
    %106 = vector.extract_strided_slice %29 {offsets = [64, 0], sizes = [32, 128], strides = [1, 1]} : vector<128x128xbf16> to vector<32x128xbf16>
    %cst_36 = arith.constant dense<0.000000e+00> : vector<8x128xf32>
    %107 = tpu.matmul %105, %106, %cst_36 {dimension_numbers = #tpu.dot_dimension_numbers<[1], [0], [0], [1], [0, 0, 1, 1], [], []>} : vector<8x32xbf16>, vector<32x128xbf16>, vector<8x128xf32> -> vector<8x128xf32>
    %108 = arith.addf %82, %107 : vector<8x128xf32>
    %109 = vector.extract_strided_slice %20 {offsets = [0, 96], sizes = [8, 32], strides = [1, 1]} : vector<8x128xbf16> to vector<8x32xbf16>
    %110 = vector.shape_cast %109 : vector<8x32xbf16> to vector<1x8x32xbf16>
    %111 = vector.extract_strided_slice %21 {offsets = [0, 96], sizes = [8, 32], strides = [1, 1]} : vector<8x128xbf16> to vector<8x32xbf16>
    %112 = vector.shape_cast %111 : vector<8x32xbf16> to vector<1x8x32xbf16>
    %113 = vector.extract_strided_slice %22 {offsets = [0, 96], sizes = [8, 32], strides = [1, 1]} : vector<8x128xbf16> to vector<8x32xbf16>
    %114 = vector.shape_cast %113 : vector<8x32xbf16> to vector<1x8x32xbf16>
    "tpu.trace_start"() <{level = 10 : i32, message = "bqd,bkd->bqk"}> : () -> ()
    %cst_37 = arith.constant dense<0.000000e+00> : vector<1x8x8xf32>
    %115 = tpu.matmul %110, %112, %cst_37 {dimension_numbers = #tpu.dot_dimension_numbers<[2], [2], [1], [1], [0, 0, 0, 1, 1, 1], [0], [0]>} : vector<1x8x32xbf16>, vector<1x8x32xbf16>, vector<1x8x8xf32> -> vector<1x8x8xf32>
    "tpu.trace_stop"() : () -> ()
    %116 = vector.shape_cast %28 : vector<8x8xf32> to vector<1x8x8xf32>
    %117 = arith.addf %115, %116 : vector<1x8x8xf32>
    %cst_38 = arith.constant dense<0xFF800000> : vector<1x8xf32>
    %118 = vector.multi_reduction <maximumf>, %117, %cst_38 [2] : vector<1x8x8xf32> to vector<1x8xf32>
    %119 = vector.shape_cast %118 : vector<1x8xf32> to vector<1x8x1xf32>
    %120 = vector.broadcast %119 : vector<1x8x1xf32> to vector<1x8x8xf32>
    %121 = arith.subf %117, %120 : vector<1x8x8xf32>
    %122 = math.exp %121 : vector<1x8x8xf32>
    %cst_39 = arith.constant dense<0.000000e+00> : vector<1x8xf32>
    %123 = vector.multi_reduction <add>, %122, %cst_39 [2] : vector<1x8x8xf32> to vector<1x8xf32>
    %124 = vector.shape_cast %123 : vector<1x8xf32> to vector<1x8x1xf32>
    %125 = tpu.reciprocal %124 {approx = true} : vector<1x8x1xf32> -> vector<1x8x1xf32>
    %126 = vector.broadcast %125 : vector<1x8x1xf32> to vector<1x8x8xf32>
    %127 = arith.mulf %122, %126 : vector<1x8x8xf32>
    %128 = arith.truncf %127 : vector<1x8x8xf32> to vector<1x8x8xbf16>
    "tpu.trace_start"() <{level = 10 : i32, message = "bqk,bkd->bqd"}> : () -> ()
    %cst_40 = arith.constant dense<0.000000e+00> : vector<1x8x32xf32>
    %129 = tpu.matmul %128, %114, %cst_40 {dimension_numbers = #tpu.dot_dimension_numbers<[2], [1], [1], [2], [0, 0, 0, 1, 1, 2], [0], [0]>} : vector<1x8x8xbf16>, vector<1x8x32xbf16>, vector<1x8x32xf32> -> vector<1x8x32xf32>
    "tpu.trace_stop"() : () -> ()
    %130 = vector.shape_cast %129 : vector<1x8x32xf32> to vector<8x32xf32>
    %131 = arith.truncf %130 : vector<8x32xf32> to vector<8x32xbf16>
    %132 = vector.extract_strided_slice %29 {offsets = [96, 0], sizes = [32, 128], strides = [1, 1]} : vector<128x128xbf16> to vector<32x128xbf16>
    %cst_41 = arith.constant dense<0.000000e+00> : vector<8x128xf32>
    %133 = tpu.matmul %131, %132, %cst_41 {dimension_numbers = #tpu.dot_dimension_numbers<[1], [0], [0], [1], [0, 0, 1, 1], [], []>} : vector<8x32xbf16>, vector<32x128xbf16>, vector<8x128xf32> -> vector<8x128xf32>
    %134 = arith.addf %108, %133 : vector<8x128xf32>
    %135 = arith.addf %1, %134 : vector<8x128xf32>
    %c0_42 = arith.constant 0 : index
    %c0_43 = arith.constant 0 : index
    %136 = vector.load %arg9[%c0_42, %c0_43] : memref<1x128xf32, #tpu.memory_space<vmem>>, vector<1x128xf32>
    %137 = vector.broadcast %136 : vector<1x128xf32> to vector<8x128xf32>
    %138 = arith.addf %135, %137 : vector<8x128xf32>
    %139 = arith.truncf %138 : vector<8x128xf32> to vector<8x128xbf16>
    %c0_44 = arith.constant 0 : index
    %c0_45 = arith.constant 0 : index
    %140 = vector.load %arg10[%c0_44, %c0_45] : memref<128x256xbf16, #tpu.memory_space<vmem>>, vector<128x256xbf16>
    %cst_46 = arith.constant dense<0.000000e+00> : vector<8x256xf32>
    %141 = tpu.matmul %139, %140, %cst_46 {dimension_numbers = #tpu.dot_dimension_numbers<[1], [0], [0], [1], [0, 0, 1, 1], [], []>} : vector<8x128xbf16>, vector<128x256xbf16>, vector<8x256xf32> -> vector<8x256xf32>
    %c0_47 = arith.constant 0 : index
    %c0_48 = arith.constant 0 : index
    %142 = vector.load %arg11[%c0_47, %c0_48] : memref<1x256xf32, #tpu.memory_space<vmem>>, vector<1x256xf32>
    %143 = vector.broadcast %142 : vector<1x256xf32> to vector<8x256xf32>
    %144 = arith.addf %141, %143 : vector<8x256xf32>
    %cst_49 = arith.constant 5.000000e-01 : f32
    %145 = vector.broadcast %cst_49 : f32 to vector<8x256xf32>
    %146 = arith.mulf %145, %144 : vector<8x256xf32>
    %cst_50 = arith.constant 2.000000e+00 : f32
    %147 = math.sqrt %cst_50 : f32
    %148 = vector.broadcast %147 : f32 to vector<8x256xf32>
    %149 = arith.divf %144, %148 : vector<8x256xf32>
    %150 = math.erf %149 : vector<8x256xf32>
    %cst_51 = arith.constant 1.000000e+00 : f32
    %151 = vector.broadcast %cst_51 : f32 to vector<8x256xf32>
    %152 = arith.addf %151, %150 : vector<8x256xf32>
    %153 = arith.mulf %146, %152 : vector<8x256xf32>
    %154 = arith.truncf %153 : vector<8x256xf32> to vector<8x256xbf16>
    %c0_52 = arith.constant 0 : index
    %c0_53 = arith.constant 0 : index
    %155 = vector.load %arg12[%c0_52, %c0_53] : memref<256x256xbf16, #tpu.memory_space<vmem>>, vector<256x256xbf16>
    %cst_54 = arith.constant dense<0.000000e+00> : vector<8x256xf32>
    %156 = tpu.matmul %154, %155, %cst_54 {dimension_numbers = #tpu.dot_dimension_numbers<[1], [0], [0], [1], [0, 0, 1, 1], [], []>} : vector<8x256xbf16>, vector<256x256xbf16>, vector<8x256xf32> -> vector<8x256xf32>
    %c0_55 = arith.constant 0 : index
    %c0_56 = arith.constant 0 : index
    %157 = vector.load %arg13[%c0_55, %c0_56] : memref<1x256xf32, #tpu.memory_space<vmem>>, vector<1x256xf32>
    %158 = vector.broadcast %157 : vector<1x256xf32> to vector<8x256xf32>
    %159 = arith.addf %156, %158 : vector<8x256xf32>
    %cst_57 = arith.constant 5.000000e-01 : f32
    %160 = vector.broadcast %cst_57 : f32 to vector<8x256xf32>
    %161 = arith.mulf %160, %159 : vector<8x256xf32>
    %cst_58 = arith.constant 2.000000e+00 : f32
    %162 = math.sqrt %cst_58 : f32
    %163 = vector.broadcast %162 : f32 to vector<8x256xf32>
    %164 = arith.divf %159, %163 : vector<8x256xf32>
    %165 = math.erf %164 : vector<8x256xf32>
    %cst_59 = arith.constant 1.000000e+00 : f32
    %166 = vector.broadcast %cst_59 : f32 to vector<8x256xf32>
    %167 = arith.addf %166, %165 : vector<8x256xf32>
    %168 = arith.mulf %161, %167 : vector<8x256xf32>
    %169 = arith.truncf %168 : vector<8x256xf32> to vector<8x256xbf16>
    %c0_60 = arith.constant 0 : index
    %c0_61 = arith.constant 0 : index
    %170 = vector.load %arg14[%c0_60, %c0_61] : memref<256x128xbf16, #tpu.memory_space<vmem>>, vector<256x128xbf16>
    %cst_62 = arith.constant dense<0.000000e+00> : vector<8x128xf32>
    %171 = tpu.matmul %169, %170, %cst_62 {dimension_numbers = #tpu.dot_dimension_numbers<[1], [0], [0], [1], [0, 0, 1, 1], [], []>} : vector<8x256xbf16>, vector<256x128xbf16>, vector<8x128xf32> -> vector<8x128xf32>
    %c0_63 = arith.constant 0 : index
    %c0_64 = arith.constant 0 : index
    %172 = vector.load %arg15[%c0_63, %c0_64] : memref<1x128xf32, #tpu.memory_space<vmem>>, vector<1x128xf32>
    %173 = vector.broadcast %172 : vector<1x128xf32> to vector<8x128xf32>
    %174 = arith.addf %171, %173 : vector<8x128xf32>
    %175 = vector.shape_cast %174 : vector<8x128xf32> to vector<1x8x128xf32>
    %c0_65 = arith.constant 0 : index
    %c0_66 = arith.constant 0 : index
    %c0_67 = arith.constant 0 : index
    %176 = vector.load %arg16[%c0_65, %c0_66, %c0_67] : memref<1x8x128xf32, #tpu.memory_space<vmem>>, vector<1x8x128xf32>
    tpu.vector_store %arg16[%c0_65, %c0_66, %c0_67], %175 {strides = array<i32>} : memref<1x8x128xf32, #tpu.memory_space<vmem>>, vector<1x8x128xf32>,
    return
  }
  func.func @transform_0(%arg0: i32) -> (i32, i32, i32) {
    %c0_i32 = arith.constant 0 : i32
    %c0_i32_0 = arith.constant 0 : i32
    %c0_i32_1 = arith.constant 0 : i32
    return %arg0, %c0_i32, %c0_i32_0 : i32, i32, i32
  }
  func.func @transform_1(%arg0: i32) -> (i32, i32) {
    %c0_i32 = arith.constant 0 : i32
    %c0_i32_0 = arith.constant 0 : i32
    %c0_i32_1 = arith.constant 0 : i32
    return %c0_i32, %c0_i32_0 : i32, i32
  }
  func.func @transform_2(%arg0: i32) -> (i32, i32) {
    %c0_i32 = arith.constant 0 : i32
    %c0_i32_0 = arith.constant 0 : i32
    %c0_i32_1 = arith.constant 0 : i32
    return %c0_i32, %c0_i32_0 : i32, i32
  }
  func.func @transform_3(%arg0: i32) -> (i32, i32) {
    %c0_i32 = arith.constant 0 : i32
    %c0_i32_0 = arith.constant 0 : i32
    %c0_i32_1 = arith.constant 0 : i32
    return %c0_i32, %c0_i32_0 : i32, i32
  }
  func.func @transform_4(%arg0: i32) -> (i32, i32) {
    %c0_i32 = arith.constant 0 : i32
    %c0_i32_0 = arith.constant 0 : i32
    %c0_i32_1 = arith.constant 0 : i32
    return %c0_i32, %c0_i32_0 : i32, i32
  }
  func.func @transform_5(%arg0: i32) -> (i32, i32) {
    %c0_i32 = arith.constant 0 : i32
    %c0_i32_0 = arith.constant 0 : i32
    %c0_i32_1 = arith.constant 0 : i32
    return %c0_i32, %c0_i32_0 : i32, i32
  }
  func.func @transform_6(%arg0: i32) -> (i32, i32) {
    %c0_i32 = arith.constant 0 : i32
    %c0_i32_0 = arith.constant 0 : i32
    %c0_i32_1 = arith.constant 0 : i32
    return %c0_i32, %c0_i32_0 : i32, i32
  }
  func.func @transform_7(%arg0: i32) -> (i32, i32) {
    %c0_i32 = arith.constant 0 : i32
    %c0_i32_0 = arith.constant 0 : i32
    %c0_i32_1 = arith.constant 0 : i32
    return %c0_i32, %c0_i32_0 : i32, i32
  }
  func.func @transform_8(%arg0: i32) -> (i32, i32) {
    %c0_i32 = arith.constant 0 : i32
    %c0_i32_0 = arith.constant 0 : i32
    %c0_i32_1 = arith.constant 0 : i32
    return %c0_i32, %c0_i32_0 : i32, i32
  }
  func.func @transform_9(%arg0: i32) -> (i32, i32) {
    %c0_i32 = arith.constant 0 : i32
    %c0_i32_0 = arith.constant 0 : i32
    %c0_i32_1 = arith.constant 0 : i32
    return %c0_i32, %c0_i32_0 : i32, i32
  }
  func.func @transform_10(%arg0: i32) -> (i32, i32) {
    %c0_i32 = arith.constant 0 : i32
    %c0_i32_0 = arith.constant 0 : i32
    %c0_i32_1 = arith.constant 0 : i32
    return %c0_i32, %c0_i32_0 : i32, i32
  }
  func.func @transform_11(%arg0: i32) -> (i32, i32) {
    %c0_i32 = arith.constant 0 : i32
    %c0_i32_0 = arith.constant 0 : i32
    %c0_i32_1 = arith.constant 0 : i32
    return %c0_i32, %c0_i32_0 : i32, i32
  }
  func.func @transform_12(%arg0: i32) -> (i32, i32) {
    %c0_i32 = arith.constant 0 : i32
    %c0_i32_0 = arith.constant 0 : i32
    %c0_i32_1 = arith.constant 0 : i32
    return %c0_i32, %c0_i32_0 : i32, i32
  }
  func.func @transform_13(%arg0: i32) -> (i32, i32) {
    %c0_i32 = arith.constant 0 : i32
    %c0_i32_0 = arith.constant 0 : i32
    %c0_i32_1 = arith.constant 0 : i32
    return %c0_i32, %c0_i32_0 : i32, i32
  }
  func.func @transform_14(%arg0: i32) -> (i32, i32) {
    %c0_i32 = arith.constant 0 : i32
    %c0_i32_0 = arith.constant 0 : i32
    %c0_i32_1 = arith.constant 0 : i32
    return %c0_i32, %c0_i32_0 : i32, i32
  }
  func.func @transform_15(%arg0: i32) -> (i32, i32, i32) {
    %c0_i32 = arith.constant 0 : i32
    %c0_i32_0 = arith.constant 0 : i32
    %c0_i32_1 = arith.constant 0 : i32
    return %arg0, %c0_i32, %c0_i32_0 : i32, i32, i32
  }
}

</mosaic_0001>

<llo_original>
// kernel: tpu_custom_call.1
$region0: #{tpu_custom_call.1}
  #allocation0 [shape = 'u32[]', space=smem, size = 0x4, offset = 0x4, fixed_abs, tag = 'smem constant byte address 0x4 - core index']
  #allocation1 [shape = 'u32[144,128]{1,0:T(1,128)}', space=vmem, size = 0x12000, scoped, tag = 'internal scratch']
  %s0 = inlined_call_operand.hbm [shape: f32[2,8,128], index: 0, kind: input, shape index: {}]
  %s1 = inlined_call_operand.hbm [shape: bf16[128,128], index: 1, kind: input, shape index: {}]
  %s2 = inlined_call_operand.vmem [shape: f32[1,128], index: 2, kind: input, shape index: {}]
  %s3 = inlined_call_operand.hbm [shape: bf16[128,128], index: 3, kind: input, shape index: {}]
  %s4 = inlined_call_operand.vmem [shape: f32[1,128], index: 4, kind: input, shape index: {}]
  %s5 = inlined_call_operand.hbm [shape: bf16[128,128], index: 5, kind: input, shape index: {}]
  %s6 = inlined_call_operand.vmem [shape: f32[1,128], index: 6, kind: input, shape index: {}]
  %s7 = inlined_call_operand.hbm [shape: bf16[128,128], index: 7, kind: input, shape index: {}]
  %s8 = inlined_call_operand.vmem [shape: f32[1,128], index: 8, kind: input, shape index: {}]
  %s9 = inlined_call_operand.hbm [shape: bf16[128,256], index: 9, kind: input, shape index: {}]
  %s10 = inlined_call_operand.vmem [shape: f32[1,256], index: 10, kind: input, shape index: {}]
  %s11 = inlined_call_operand.hbm [shape: bf16[256,256], index: 11, kind: input, shape index: {}]
  %s12 = inlined_call_operand.vmem [shape: f32[1,256], index: 12, kind: input, shape index: {}]
  %s13 = inlined_call_operand.hbm [shape: bf16[256,128], index: 13, kind: input, shape index: {}]
  %s14 = inlined_call_operand.vmem [shape: f32[1,128], index: 14, kind: input, shape index: {}]
  %s15 = inlined_call_operand.hbm [shape: f32[2,8,128], index: 15, kind: output, shape index: {}]
  %s16 = sld [smem:[#allocation0]]
  $region125: #{tpu_custom_call.1} parent=0
    _
  %s18 = ssub.s32 1, %s16
  %s19 = scalar_select 0, %s18, %s16
  $region1: #{tpu_custom_call.1} parent=0
    #allocation2 [shape = 'u8[8192]{0}', space=vmem, size = 0x2000, scoped, tag = 'input window, operand 0']
    #allocation3 [shape = 's32[2]{0}', space=sflag, size = 0x8, scoped, tag = 'scoped memory for tpu_custom_call.1']
    #allocation4 [shape = 's32[2]{0}', space=sflag, size = 0x8, scoped, tag = 'scoped memory for tpu_custom_call.1']
    #allocation5 [shape = 'u8[32768]{0}', space=vmem, size = 0x8000, scoped, tag = 'input window, operand 1, single buffered']
    #allocation6 [shape = 's32[1]{0}', space=sflag, size = 0x4, scoped, tag = 'scoped memory for tpu_custom_call.1']
    #allocation7 [shape = 'u8[32768]{0}', space=vmem, size = 0x8000, scoped, tag = 'input window, operand 3, single buffered']
    #allocation8 [shape = 'u8[32768]{0}', space=vmem, size = 0x8000, scoped, tag = 'input window, operand 5, single buffered']
    #allocation9 [shape = 's32[1]{0}', space=sflag, size = 0x4, scoped, tag = 'scoped memory for tpu_custom_call.1']
    #allocation10 [shape = 'u8[32768]{0}', space=vmem, size = 0x8000, scoped, tag = 'input window, operand 7, single buffered']
    #allocation11 [shape = 'u8[65536]{0}', space=vmem, size = 0x10000, scoped, tag = 'input window, operand 9, single buffered']
    #allocation12 [shape = 's32[1]{0}', space=sflag, size = 0x4, scoped, tag = 'scoped memory for tpu_custom_call.1']
    #allocation13 [shape = 'u8[131072]{0}', space=vmem, size = 0x20000, scoped, tag = 'input window, operand 11, single buffered']
    #allocation14 [shape = 'u8[65536]{0}', space=vmem, size = 0x10000, scoped, tag = 'input window, operand 13, single buffered']
    #allocation15 [shape = 's32[1]{0}', space=sflag, size = 0x4, scoped, tag = 'scoped memory for tpu_custom_call.1']
    #allocation16 [shape = 'u8[8192]{0}', space=vmem, size = 0x2000, scoped, tag = 'output window, operand 0']
    %20 = vsyncpa [#allocation3], 0
    %s21 = scalar_lea.sflag [#allocation3], 1
    %22 = vsyncpa %s21, 0
    %23 = vsyncpa [#allocation6], 0
    %24 = vsyncpa [#allocation9], 0
    %25 = vsyncpa [#allocation12], 0
    %26 = vsyncpa [#allocation15], 0
    %27 = vsyncpa [#allocation4], 0
    %s28 = scalar_lea.sflag [#allocation4], 1
    %29 = vsyncpa %s28, 0
    loop: start=0, step=1, limit=4
    $region2: #{tpu_custom_call.1} parent=1 // loop_pre_header
      _
    $region3: #{tpu_custom_call.1} parent=1 // loop_header
      %s31 = sphi 0, %s35
      %p32 = scmp.ge.s32.totalorder %s31, 4
      %s41 = sphi 0, %s43
      %s44 = sphi 0, %s41
      %s45 = sphi 0, %s44
      %s61 = sphi 0, %s45
      %s65 = sphi 0, %s65
      %s67 = sphi 0, %s65
      %s68 = sphi 0, %s67
      %s82 = sphi 0, %s68
      %s86 = sphi 0, %s86
      %s88 = sphi 0, %s86
      %s89 = sphi 0, %s88
      %s103 = sphi 0, %s89
      %s107 = sphi 0, %s107
      %s109 = sphi 0, %s107
      %s110 = sphi 0, %s109
      %s124 = sphi 0, %s110
      %s128 = sphi 0, %s128
      %s130 = sphi 0, %s128
      %s131 = sphi 0, %s130
      %s145 = sphi 0, %s131
      %s149 = sphi 0, %s149
      %s151 = sphi 0, %s149
      %s152 = sphi 0, %s151
      %s166 = sphi 0, %s152
      %s170 = sphi 0, %s170
      %s172 = sphi 0, %s170
      %s173 = sphi 0, %s172
      %s187 = sphi 0, %s173
      %s191 = sphi 0, %s191
      %s193 = sphi 0, %s191
      %s194 = sphi 0, %s193
      %s208 = sphi 0, %s194
      %s212 = sphi 0, %s212
      %s214 = sphi 0, %s212
      %s215 = sphi 0, %s214
      %s229 = sphi 0, %s215
      %s233 = sphi 0, %s233
      %s235 = sphi 0, %s233
      %s236 = sphi 0, %s235
      %s250 = sphi 0, %s236
      %s254 = sphi 0, %s254
      %s256 = sphi 0, %s254
      %s257 = sphi 0, %s256
      %s271 = sphi 0, %s257
      %s275 = sphi 0, %s275
      %s277 = sphi 0, %s275
      %s278 = sphi 0, %s277
      %s292 = sphi 0, %s278
      %s296 = sphi 0, %s296
      %s298 = sphi 0, %s296
      %s299 = sphi 0, %s298
      %s313 = sphi 0, %s299
      %s317 = sphi 0, %s317
      %s319 = sphi 0, %s317
      %s320 = sphi 0, %s319
      %s334 = sphi 0, %s320
      %s338 = sphi 0, %s338
      %s340 = sphi 0, %s338
      %s341 = sphi 0, %s340
      %s355 = sphi 0, %s341
      %s361 = sphi 0, %s363
      %s364 = sphi 0, %s361
      %s365 = sphi 0, %s364
      %s381 = sphi 0, %s365
    $region4: #{tpu_custom_call.1} parent=1 // loop_header_branch
      %34 = sbr.rel (%p32) target = $region8
    $region5: #{tpu_custom_call.1} parent=1 // loop_body
      %s36 = ssub.s32 %s31, 1
      %s37 = ssub.s32 %s31, 2
      %s38 = sadd.s32 %s31, 1
      %s39 = ssub.s32 %s31, %s38
      %p40 = scmp.eq.s32.totalorder %s39, 0
      %s42 = sadd.s32 %s41, 1
      %s43 = scalar_select %p40, %s41, %s42
      %p46 = pneg %p40
      %p47 = scmp.eq.s32.totalorder %s31, 1
      %p48 = por %p46, %p47
      %p49 = scmp.ne.s32.totalorder %s41, %s44
      %p50 = scmp.eq.s32.totalorder %s31, 0
      %p51 = por %p49, %p50
      %p52 = scmp.ne.s32.totalorder %s41, %s44
      %p53 = scmp.eq.s32.totalorder %s36, 1
      %p54 = por %p52, %p53
      %p55 = scmp.ne.s32.totalorder %s44, %s45
      %p56 = scmp.eq.s32.totalorder %s36, 0
      %p57 = por %p55, %p56
      %p58 = scmp.ne.s32.totalorder %s44, %s45
      %p59 = scmp.eq.s32.totalorder %s37, 1
      %p60 = por %p58, %p59
      %p62 = scmp.ne.s32.totalorder %s45, %s61
      %p63 = scmp.eq.s32.totalorder %s37, 0
      %p64 = por %p62, %p63
      %s66 = sadd.s32 %s65, 1
      %p69 = scmp.eq.s32.totalorder %s31, 1
      %p70 = scmp.ne.s32.totalorder %s65, %s67
      %p71 = scmp.eq.s32.totalorder %s31, 0
      %p72 = por %p70, %p71
      %p73 = scmp.ne.s32.totalorder %s65, %s67
      %p74 = scmp.eq.s32.totalorder %s36, 1
      %p75 = por %p73, %p74
      %p76 = scmp.ne.s32.totalorder %s67, %s68
      %p77 = scmp.eq.s32.totalorder %s36, 0
      %p78 = por %p76, %p77
      %p79 = scmp.ne.s32.totalorder %s67, %s68
      %p80 = scmp.eq.s32.totalorder %s37, 1
      %p81 = por %p79, %p80
      %p83 = scmp.ne.s32.totalorder %s68, %s82
      %p84 = scmp.eq.s32.totalorder %s37, 0
      %p85 = por %p83, %p84
      %s87 = sadd.s32 %s86, 1
      %p90 = scmp.eq.s32.totalorder %s31, 1
      %p91 = scmp.ne.s32.totalorder %s86, %s88
      %p92 = scmp.eq.s32.totalorder %s31, 0
      %p93 = por %p91, %p92
      %p94 = scmp.ne.s32.totalorder %s86, %s88
      %p95 = scmp.eq.s32.totalorder %s36, 1
      %p96 = por %p94, %p95
      %p97 = scmp.ne.s32.totalorder %s88, %s89
      %p98 = scmp.eq.s32.totalorder %s36, 0
      %p99 = por %p97, %p98
      %p100 = scmp.ne.s32.totalorder %s88, %s89
      %p101 = scmp.eq.s32.totalorder %s37, 1
      %p102 = por %p100, %p101
      %p104 = scmp.ne.s32.totalorder %s89, %s103
      %p105 = scmp.eq.s32.totalorder %s37, 0
      %p106 = por %p104, %p105
      %s108 = sadd.s32 %s107, 1
      %p111 = scmp.eq.s32.totalorder %s31, 1
      %p112 = scmp.ne.s32.totalorder %s107, %s109
      %p113 = scmp.eq.s32.totalorder %s31, 0
      %p114 = por %p112, %p113
      %p115 = scmp.ne.s32.totalorder %s107, %s109
      %p116 = scmp.eq.s32.totalorder %s36, 1
      %p117 = por %p115, %p116
      %p118 = scmp.ne.s32.totalorder %s109, %s110
      %p119 = scmp.eq.s32.totalorder %s36, 0
      %p120 = por %p118, %p119
      %p121 = scmp.ne.s32.totalorder %s109, %s110
      %p122 = scmp.eq.s32.totalorder %s37, 1
      %p123 = por %p121, %p122
      %p125 = scmp.ne.s32.totalorder %s110, %s124
      %p126 = scmp.eq.s32.totalorder %s37, 0
      %p127 = por %p125, %p126
      %s129 = sadd.s32 %s128, 1
      %p132 = scmp.eq.s32.totalorder %s31, 1
      %p133 = scmp.ne.s32.totalorder %s128, %s130
      %p134 = scmp.eq.s32.totalorder %s31, 0
      %p135 = por %p133, %p134
      %p136 = scmp.ne.s32.totalorder %s128, %s130
      %p137 = scmp.eq.s32.totalorder %s36, 1
      %p138 = por %p136, %p137
      %p139 = scmp.ne.s32.totalorder %s130, %s131
      %p140 = scmp.eq.s32.totalorder %s36, 0
      %p141 = por %p139, %p140
      %p142 = scmp.ne.s32.totalorder %s130, %s131
      %p143 = scmp.eq.s32.totalorder %s37, 1
      %p144 = por %p142, %p143
      %p146 = scmp.ne.s32.totalorder %s131, %s145
      %p147 = scmp.eq.s32.totalorder %s37, 0
      %p148 = por %p146, %p147
      %s150 = sadd.s32 %s149, 1
      %p153 = scmp.eq.s32.totalorder %s31, 1
      %p154 = scmp.ne.s32.totalorder %s149, %s151
      %p155 = scmp.eq.s32.totalorder %s31, 0
      %p156 = por %p154, %p155
      %p157 = scmp.ne.s32.totalorder %s149, %s151
      %p158 = scmp.eq.s32.totalorder %s36, 1
      %p159 = por %p157, %p158
      %p160 = scmp.ne.s32.totalorder %s151, %s152
      %p161 = scmp.eq.s32.totalorder %s36, 0
      %p162 = por %p160, %p161
      %p163 = scmp.ne.s32.totalorder %s151, %s152
      %p164 = scmp.eq.s32.totalorder %s37, 1
      %p165 = por %p163, %p164
      %p167 = scmp.ne.s32.totalorder %s152, %s166
      %p168 = scmp.eq.s32.totalorder %s37, 0
      %p169 = por %p167, %p168
      %s171 = sadd.s32 %s170, 1
      %p174 = scmp.eq.s32.totalorder %s31, 1
      %p175 = scmp.ne.s32.totalorder %s170, %s172
      %p176 = scmp.eq.s32.totalorder %s31, 0
      %p177 = por %p175, %p176
      %p178 = scmp.ne.s32.totalorder %s170, %s172
      %p179 = scmp.eq.s32.totalorder %s36, 1
      %p180 = por %p178, %p179
      %p181 = scmp.ne.s32.totalorder %s172, %s173
      %p182 = scmp.eq.s32.totalorder %s36, 0
      %p183 = por %p181, %p182
      %p184 = scmp.ne.s32.totalorder %s172, %s173
      %p185 = scmp.eq.s32.totalorder %s37, 1
      %p186 = por %p184, %p185
      %p188 = scmp.ne.s32.totalorder %s173, %s187
      %p189 = scmp.eq.s32.totalorder %s37, 0
      %p190 = por %p188, %p189
      %s192 = sadd.s32 %s191, 1
      %p195 = scmp.eq.s32.totalorder %s31, 1
      %p196 = scmp.ne.s32.totalorder %s191, %s193
      %p197 = scmp.eq.s32.totalorder %s31, 0
      %p198 = por %p196, %p197
      %p199 = scmp.ne.s32.totalorder %s191, %s193
      %p200 = scmp.eq.s32.totalorder %s36, 1
      %p201 = por %p199, %p200
      %p202 = scmp.ne.s32.totalorder %s193, %s194
      %p203 = scmp.eq.s32.totalorder %s36, 0
      %p204 = por %p202, %p203
      %p205 = scmp.ne.s32.totalorder %s193, %s194
      %p206 = scmp.eq.s32.totalorder %s37, 1
      %p207 = por %p205, %p206
      %p209 = scmp.ne.s32.totalorder %s194, %s208
      %p210 = scmp.eq.s32.totalorder %s37, 0
      %p211 = por %p209, %p210
      %s213 = sadd.s32 %s212, 1
      %p216 = scmp.eq.s32.totalorder %s31, 1
      %p217 = scmp.ne.s32.totalorder %s212, %s214
      %p218 = scmp.eq.s32.totalorder %s31, 0
      %p219 = por %p217, %p218
      %p220 = scmp.ne.s32.totalorder %s212, %s214
      %p221 = scmp.eq.s32.totalorder %s36, 1
      %p222 = por %p220, %p221
      %p223 = scmp.ne.s32.totalorder %s214, %s215
      %p224 = scmp.eq.s32.totalorder %s36, 0
      %p225 = por %p223, %p224
      %p226 = scmp.ne.s32.totalorder %s214, %s215
      %p227 = scmp.eq.s32.totalorder %s37, 1
      %p228 = por %p226, %p227
      %p230 = scmp.ne.s32.totalorder %s215, %s229
      %p231 = scmp.eq.s32.totalorder %s37, 0
      %p232 = por %p230, %p231
      %s234 = sadd.s32 %s233, 1
      %p237 = scmp.eq.s32.totalorder %s31, 1
      %p238 = scmp.ne.s32.totalorder %s233, %s235
      %p239 = scmp.eq.s32.totalorder %s31, 0
      %p240 = por %p238, %p239
      %p241 = scmp.ne.s32.totalorder %s233, %s235
      %p242 = scmp.eq.s32.totalorder %s36, 1
      %p243 = por %p241, %p242
      %p244 = scmp.ne.s32.totalorder %s235, %s236
      %p245 = scmp.eq.s32.totalorder %s36, 0
      %p246 = por %p244, %p245
      %p247 = scmp.ne.s32.totalorder %s235, %s236
      %p248 = scmp.eq.s32.totalorder %s37, 1
      %p249 = por %p247, %p248
      %p251 = scmp.ne.s32.totalorder %s236, %s250
      %p252 = scmp.eq.s32.totalorder %s37, 0
      %p253 = por %p251, %p252
      %s255 = sadd.s32 %s254, 1
      %p258 = scmp.eq.s32.totalorder %s31, 1
      %p259 = scmp.ne.s32.totalorder %s254, %s256
      %p260 = scmp.eq.s32.totalorder %s31, 0
      %p261 = por %p259, %p260
      %p262 = scmp.ne.s32.totalorder %s254, %s256
      %p263 = scmp.eq.s32.totalorder %s36, 1
      %p264 = por %p262, %p263
      %p265 = scmp.ne.s32.totalorder %s256, %s257
      %p266 = scmp.eq.s32.totalorder %s36, 0
      %p267 = por %p265, %p266
      %p268 = scmp.ne.s32.totalorder %s256, %s257
      %p269 = scmp.eq.s32.totalorder %s37, 1
      %p270 = por %p268, %p269
      %p272 = scmp.ne.s32.totalorder %s257, %s271
      %p273 = scmp.eq.s32.totalorder %s37, 0
      %p274 = por %p272, %p273
      %s276 = sadd.s32 %s275, 1
      %p279 = scmp.eq.s32.totalorder %s31, 1
      %p280 = scmp.ne.s32.totalorder %s275, %s277
      %p281 = scmp.eq.s32.totalorder %s31, 0
      %p282 = por %p280, %p281
      %p283 = scmp.ne.s32.totalorder %s275, %s277
      %p284 = scmp.eq.s32.totalorder %s36, 1
      %p285 = por %p283, %p284
      %p286 = scmp.ne.s32.totalorder %s277, %s278
      %p287 = scmp.eq.s32.totalorder %s36, 0
      %p288 = por %p286, %p287
      %p289 = scmp.ne.s32.totalorder %s277, %s278
      %p290 = scmp.eq.s32.totalorder %s37, 1
      %p291 = por %p289, %p290
      %p293 = scmp.ne.s32.totalorder %s278, %s292
      %p294 = scmp.eq.s32.totalorder %s37, 0
      %p295 = por %p293, %p294
      %s297 = sadd.s32 %s296, 1
      %p300 = scmp.eq.s32.totalorder %s31, 1
      %p301 = scmp.ne.s32.totalorder %s296, %s298
      %p302 = scmp.eq.s32.totalorder %s31, 0
      %p303 = por %p301, %p302
      %p304 = scmp.ne.s32.totalorder %s296, %s298
      %p305 = scmp.eq.s32.totalorder %s36, 1
      %p306 = por %p304, %p305
      %p307 = scmp.ne.s32.totalorder %s298, %s299
      %p308 = scmp.eq.s32.totalorder %s36, 0
      %p309 = por %p307, %p308
      %p310 = scmp.ne.s32.totalorder %s298, %s299
      %p311 = scmp.eq.s32.totalorder %s37, 1
      %p312 = por %p310, %p311
      %p314 = scmp.ne.s32.totalorder %s299, %s313
      %p315 = scmp.eq.s32.totalorder %s37, 0
      %p316 = por %p314, %p315
      %s318 = sadd.s32 %s317, 1
      %p321 = scmp.eq.s32.totalorder %s31, 1
      %p322 = scmp.ne.s32.totalorder %s317, %s319
      %p323 = scmp.eq.s32.totalorder %s31, 0
      %p324 = por %p322, %p323
      %p325 = scmp.ne.s32.totalorder %s317, %s319
      %p326 = scmp.eq.s32.totalorder %s36, 1
      %p327 = por %p325, %p326
      %p328 = scmp.ne.s32.totalorder %s319, %s320
      %p329 = scmp.eq.s32.totalorder %s36, 0
      %p330 = por %p328, %p329
      %p331 = scmp.ne.s32.totalorder %s319, %s320
      %p332 = scmp.eq.s32.totalorder %s37, 1
      %p333 = por %p331, %p332
      %p335 = scmp.ne.s32.totalorder %s320, %s334
      %p336 = scmp.eq.s32.totalorder %s37, 0
      %p337 = por %p335, %p336
      %s339 = sadd.s32 %s338, 1
      %p342 = scmp.eq.s32.totalorder %s31, 1
      %p343 = scmp.ne.s32.totalorder %s338, %s340
      %p344 = scmp.eq.s32.totalorder %s31, 0
      %p345 = por %p343, %p344
      %p346 = scmp.ne.s32.totalorder %s338, %s340
      %p347 = scmp.eq.s32.totalorder %s36, 1
      %p348 = por %p346, %p347
      %p349 = scmp.ne.s32.totalorder %s340, %s341
      %p350 = scmp.eq.s32.totalorder %s36, 0
      %p351 = por %p349, %p350
      %p352 = scmp.ne.s32.totalorder %s340, %s341
      %p353 = scmp.eq.s32.totalorder %s37, 1
      %p354 = por %p352, %p353
      %p356 = scmp.ne.s32.totalorder %s341, %s355
      %p357 = scmp.eq.s32.totalorder %s37, 0
      %p358 = por %p356, %p357
      %s359 = ssub.s32 %s31, %s38
      %p360 = scmp.eq.s32.totalorder %s359, 0
      %s362 = sadd.s32 %s361, 1
      %s363 = scalar_select %p360, %s361, %s362
      %p366 = pneg %p360
      %p367 = scmp.eq.s32.totalorder %s31, 1
      %p368 = por %p366, %p367
      %p369 = scmp.ne.s32.totalorder %s361, %s364
      %p370 = scmp.eq.s32.totalorder %s31, 0
      %p371 = por %p369, %p370
      %p372 = scmp.ne.s32.totalorder %s361, %s364
      %p373 = scmp.eq.s32.totalorder %s36, 1
      %p374 = por %p372, %p373
      %p375 = scmp.ne.s32.totalorder %s364, %s365
      %p376 = scmp.eq.s32.totalorder %s36, 0
      %p377 = por %p375, %p376
      %p378 = scmp.ne.s32.totalorder %s364, %s365
      %p379 = scmp.eq.s32.totalorder %s37, 1
      %p380 = por %p378, %p379
      %p382 = scmp.ne.s32.totalorder %s365, %s381
      %p383 = scmp.eq.s32.totalorder %s37, 0
      %p384 = por %p382, %p383
      %p385 = scmp.le.s32.totalorder 1, %s31
      %p386 = scmp.lt.s32.totalorder %s31, 3
      %p387 = pnand %p385, %p386
      %p388 = pneg %p387
      // Predicated region
      $region9: #{tpu_custom_call.1} parent=5 // pred_check
        _
      $region10: #{tpu_custom_call.1} parent=5 // pred_check_branch
        %390 = sbr.rel (%p387) target = $region12
      $region11: #{tpu_custom_call.1} parent=5 // pred_region
        %s391 = ssub.s32 %s31, 1
        // Predicated region
        $region13: #{tpu_custom_call.1} parent=11 // pred_check
          %p392 = pneg %p78
        $region14: #{tpu_custom_call.1} parent=11 // pred_check_branch
          %394 = sbr.rel (%p392) target = $region16
        $region15: #{tpu_custom_call.1} parent=11 // pred_region
          %s396 = ssub.s32 1024, 1024
          %397 = vsyncadd [#allocation6], %s396
          %s398 = sshll.u32 [#allocation5], 4
          %s399 = int_to_ptr.vmem [resolvable:$true] %s398
          %404 = dma.hbm_to_vmem [thread:$0]  %s1, 1024, %s399, [#allocation6], 64, 64, 4
        $region16: #{tpu_custom_call.1} parent=11 // pred_fallthru
          _
        // Predicated region
        $region17: #{tpu_custom_call.1} parent=11 // pred_check
          %p405 = pneg %p99
        $region18: #{tpu_custom_call.1} parent=11 // pred_check_branch
          %407 = sbr.rel (%p405) target = $region20
        $region19: #{tpu_custom_call.1} parent=11 // pred_region
          _
        $region20: #{tpu_custom_call.1} parent=11 // pred_fallthru
          _
        // Predicated region
        $region21: #{tpu_custom_call.1} parent=11 // pred_check
          %p408 = pneg %p120
        $region22: #{tpu_custom_call.1} parent=11 // pred_check_branch
          %410 = sbr.rel (%p408) target = $region24
        $region23: #{tpu_custom_call.1} parent=11 // pred_region
          %s412 = ssub.s32 1024, 1024
          %413 = vsyncadd [#allocation6], %s412
          %s414 = sshll.u32 [#allocation7], 4
          %s415 = int_to_ptr.vmem [resolvable:$true] %s414
          %420 = dma.hbm_to_vmem [thread:$0]  %s3, 1024, %s415, [#allocation6], 64, 64, 4
        $region24: #{tpu_custom_call.1} parent=11 // pred_fallthru
          _
        // Predicated region
        $region25: #{tpu_custom_call.1} parent=11 // pred_check
          %p421 = pneg %p141
        $region26: #{tpu_custom_call.1} parent=11 // pred_check_branch
          %423 = sbr.rel (%p421) target = $region28
        $region27: #{tpu_custom_call.1} parent=11 // pred_region
          _
        $region28: #{tpu_custom_call.1} parent=11 // pred_fallthru
          _
        // Predicated region
        $region29: #{tpu_custom_call.1} parent=11 // pred_check
          %p424 = pneg %p162
        $region30: #{tpu_custom_call.1} parent=11 // pred_check_branch
          %426 = sbr.rel (%p424) target = $region32
        $region31: #{tpu_custom_call.1} parent=11 // pred_region
          %s428 = ssub.s32 1024, 1024
          %429 = vsyncadd [#allocation9], %s428
          %s430 = sshll.u32 [#allocation8], 4
          %s431 = int_to_ptr.vmem [resolvable:$true] %s430
          %436 = dma.hbm_to_vmem [thread:$0]  %s5, 1024, %s431, [#allocation9], 64, 64, 4
        $region32: #{tpu_custom_call.1} parent=11 // pred_fallthru
          _
        // Predicated region
        $region33: #{tpu_custom_call.1} parent=11 // pred_check
          %p437 = pneg %p183
        $region34: #{tpu_custom_call.1} parent=11 // pred_check_branch
          %439 = sbr.rel (%p437) target = $region36
        $region35: #{tpu_custom_call.1} parent=11 // pred_region
          _
        $region36: #{tpu_custom_call.1} parent=11 // pred_fallthru
          _
        // Predicated region
        $region37: #{tpu_custom_call.1} parent=11 // pred_check
          %p440 = pneg %p204
        $region38: #{tpu_custom_call.1} parent=11 // pred_check_branch
          %442 = sbr.rel (%p440) target = $region40
        $region39: #{tpu_custom_call.1} parent=11 // pred_region
          %s444 = ssub.s32 1024, 1024
          %445 = vsyncadd [#allocation9], %s444
          %s446 = sshll.u32 [#allocation10], 4
          %s447 = int_to_ptr.vmem [resolvable:$true] %s446
          %452 = dma.hbm_to_vmem [thread:$0]  %s7, 1024, %s447, [#allocation9], 64, 64, 4
        $region40: #{tpu_custom_call.1} parent=11 // pred_fallthru
          _
        // Predicated region
        $region41: #{tpu_custom_call.1} parent=11 // pred_check
          %p453 = pneg %p225
        $region42: #{tpu_custom_call.1} parent=11 // pred_check_branch
          %455 = sbr.rel (%p453) target = $region44
        $region43: #{tpu_custom_call.1} parent=11 // pred_region
          _
        $region44: #{tpu_custom_call.1} parent=11 // pred_fallthru
          _
        // Predicated region
        $region45: #{tpu_custom_call.1} parent=11 // pred_check
          %p456 = pneg %p246
        $region46: #{tpu_custom_call.1} parent=11 // pred_check_branch
          %458 = sbr.rel (%p456) target = $region48
        $region47: #{tpu_custom_call.1} parent=11 // pred_region
          %s460 = ssub.s32 2048, 2048
          %461 = vsyncadd [#allocation12], %s460
          %s462 = sshll.u32 [#allocation11], 4
          %s463 = int_to_ptr.vmem [resolvable:$true] %s462
          %468 = dma.hbm_to_vmem [thread:$0]  %s9, 2048, %s463, [#allocation12], 128, 128, 8
        $region48: #{tpu_custom_call.1} parent=11 // pred_fallthru
          _
        // Predicated region
        $region49: #{tpu_custom_call.1} parent=11 // pred_check
          %p469 = pneg %p267
        $region50: #{tpu_custom_call.1} parent=11 // pred_check_branch
          %471 = sbr.rel (%p469) target = $region52
        $region51: #{tpu_custom_call.1} parent=11 // pred_region
          _
        $region52: #{tpu_custom_call.1} parent=11 // pred_fallthru
          _
        // Predicated region
        $region53: #{tpu_custom_call.1} parent=11 // pred_check
          %p472 = pneg %p288
        $region54: #{tpu_custom_call.1} parent=11 // pred_check_branch
          %474 = sbr.rel (%p472) target = $region56
        $region55: #{tpu_custom_call.1} parent=11 // pred_region
          %s476 = ssub.s32 4096, 4096
          %477 = vsyncadd [#allocation12], %s476
          %s478 = sshll.u32 [#allocation13], 4
          %s479 = int_to_ptr.vmem [resolvable:$true] %s478
          %484 = dma.hbm_to_vmem [thread:$0]  %s11, 4096, %s479, [#allocation12], 128, 128, 8
        $region56: #{tpu_custom_call.1} parent=11 // pred_fallthru
          _
        // Predicated region
        $region57: #{tpu_custom_call.1} parent=11 // pred_check
          %p485 = pneg %p309
        $region58: #{tpu_custom_call.1} parent=11 // pred_check_branch
          %487 = sbr.rel (%p485) target = $region60
        $region59: #{tpu_custom_call.1} parent=11 // pred_region
          _
        $region60: #{tpu_custom_call.1} parent=11 // pred_fallthru
          _
        // Predicated region
        $region61: #{tpu_custom_call.1} parent=11 // pred_check
          %p488 = pneg %p330
        $region62: #{tpu_custom_call.1} parent=11 // pred_check_branch
          %490 = sbr.rel (%p488) target = $region64
        $region63: #{tpu_custom_call.1} parent=11 // pred_region
          %s492 = ssub.s32 2048, 2048
          %493 = vsyncadd [#allocation15], %s492
          %s494 = sshll.u32 [#allocation14], 4
          %s495 = int_to_ptr.vmem [resolvable:$true] %s494
          %500 = dma.hbm_to_vmem [thread:$0]  %s13, 2048, %s495, [#allocation15], 64, 64, 4
        $region64: #{tpu_custom_call.1} parent=11 // pred_fallthru
          _
        // Predicated region
        $region65: #{tpu_custom_call.1} parent=11 // pred_check
          %p501 = pneg %p351
        $region66: #{tpu_custom_call.1} parent=11 // pred_check_branch
          %503 = sbr.rel (%p501) target = $region68
        $region67: #{tpu_custom_call.1} parent=11 // pred_region
          _
        $region68: #{tpu_custom_call.1} parent=11 // pred_fallthru
          _
      $region12: #{tpu_custom_call.1} parent=5 // pred_fallthru
        _
      %p504 = scmp.lt.s32.totalorder %s31, 2
      // Predicated region
      $region69: #{tpu_custom_call.1} parent=5 // pred_check
        %p505 = pneg %p504
      $region70: #{tpu_custom_call.1} parent=5 // pred_check_branch
        %507 = sbr.rel (%p505) target = $region72
      $region71: #{tpu_custom_call.1} parent=5 // pred_region
        // Predicated region
        $region73: #{tpu_custom_call.1} parent=71 // pred_check
          %p508 = pneg %p51
        $region74: #{tpu_custom_call.1} parent=71 // pred_check_branch
          %510 = sbr.rel (%p508) target = $region76
        $region75: #{tpu_custom_call.1} parent=71 // pred_region
          %s511 = sand.u32 %s41, 1
          %s512 = scalar_lea.sflag [#allocation3], %s511
          %s513 = sand.u32 %s41, 1
          %s514 = smul.addr %s513, 8
          %s515 = scalar_lea.vmem [#allocation2], %s514
          %s517 = ssub.s32 128, 128
          %518 = vsyncadd %s512, %s517
          %s519 = smul.addr %s31, 128
          %s520 = scalar_lea.hbm %s0, %s519
          %s522 = sshll.u32 %s515, 4
          %s523 = int_to_ptr.vmem [resolvable:$true] %s522
          %525 = dma.hbm_to_vmem [thread:$0]  %s520, 128, %s523, %s512
        $region76: #{tpu_custom_call.1} parent=71 // pred_fallthru
          _
      $region72: #{tpu_custom_call.1} parent=5 // pred_fallthru
        _
      %p526 = scmp.le.s32.totalorder 1, %s31
      %p527 = scmp.lt.s32.totalorder %s31, 3
      %p528 = pnand %p526, %p527
      %p529 = pneg %p528
      // Predicated region
      $region77: #{tpu_custom_call.1} parent=5 // pred_check
        _
      $region78: #{tpu_custom_call.1} parent=5 // pred_check_branch
        %531 = sbr.rel (%p528) target = $region80
      $region79: #{tpu_custom_call.1} parent=5 // pred_region
        %s532 = ssub.s32 %s31, 1
        %s533 = sand.u32 %s44, 1
        %s534 = scalar_lea.sflag [#allocation3], %s533
        %s535 = sand.u32 %s44, 1
        %s536 = smul.addr %s535, 8
        %s537 = scalar_lea.vmem [#allocation2], %s536
        // Predicated region
        $region81: #{tpu_custom_call.1} parent=79 // pred_check
          %p538 = pneg %p57
        $region82: #{tpu_custom_call.1} parent=79 // pred_check_branch
          %540 = sbr.rel (%p538) target = $region84
        $region83: #{tpu_custom_call.1} parent=79 // pred_region
          %541 = dma.done %s534, 128
        $region84: #{tpu_custom_call.1} parent=79 // pred_fallthru
          _
        // Predicated region
        $region85: #{tpu_custom_call.1} parent=79 // pred_check
          %p542 = pneg %p78
        $region86: #{tpu_custom_call.1} parent=79 // pred_check_branch
          %544 = sbr.rel (%p542) target = $region88
        $region87: #{tpu_custom_call.1} parent=79 // pred_region
          %545 = dma.done [#allocation6], 1024
        $region88: #{tpu_custom_call.1} parent=79 // pred_fallthru
          _
        // Predicated region
        $region89: #{tpu_custom_call.1} parent=79 // pred_check
          %p546 = pneg %p120
        $region90: #{tpu_custom_call.1} parent=79 // pred_check_branch
          %548 = sbr.rel (%p546) target = $region92
        $region91: #{tpu_custom_call.1} parent=79 // pred_region
          %549 = dma.done [#allocation6], 1024
        $region92: #{tpu_custom_call.1} parent=79 // pred_fallthru
          _
        // Predicated region
        $region93: #{tpu_custom_call.1} parent=79 // pred_check
          %p550 = pneg %p162
        $region94: #{tpu_custom_call.1} parent=79 // pred_check_branch
          %552 = sbr.rel (%p550) target = $region96
        $region95: #{tpu_custom_call.1} parent=79 // pred_region
          %553 = dma.done [#allocation9], 1024
        $region96: #{tpu_custom_call.1} parent=79 // pred_fallthru
          _
        // Predicated region
        $region97: #{tpu_custom_call.1} parent=79 // pred_check
          %p554 = pneg %p204
        $region98: #{tpu_custom_call.1} parent=79 // pred_check_branch
          %556 = sbr.rel (%p554) target = $region100
        $region99: #{tpu_custom_call.1} parent=79 // pred_region
          %557 = dma.done [#allocation9], 1024
        $region100: #{tpu_custom_call.1} parent=79 // pred_fallthru
          _
        // Predicated region
        $region101: #{tpu_custom_call.1} parent=79 // pred_check
          %p558 = pneg %p246
        $region102: #{tpu_custom_call.1} parent=79 // pred_check_branch
          %560 = sbr.rel (%p558) target = $region104
        $region103: #{tpu_custom_call.1} parent=79 // pred_region
          %561 = dma.done [#allocation12], 2048
        $region104: #{tpu_custom_call.1} parent=79 // pred_fallthru
          _
        // Predicated region
        $region105: #{tpu_custom_call.1} parent=79 // pred_check
          %p562 = pneg %p288
        $region106: #{tpu_custom_call.1} parent=79 // pred_check_branch
          %564 = sbr.rel (%p562) target = $region108
        $region107: #{tpu_custom_call.1} parent=79 // pred_region
          %565 = dma.done [#allocation12], 4096
        $region108: #{tpu_custom_call.1} parent=79 // pred_fallthru
          _
        // Predicated region
        $region109: #{tpu_custom_call.1} parent=79 // pred_check
          %p566 = pneg %p330
        $region110: #{tpu_custom_call.1} parent=79 // pred_check_branch
          %568 = sbr.rel (%p566) target = $region112
        $region111: #{tpu_custom_call.1} parent=79 // pred_region
          %569 = dma.done [#allocation15], 2048
        $region112: #{tpu_custom_call.1} parent=79 // pred_fallthru
          _
        %s570 = sand.u32 %s44, 1
        %s571 = scalar_lea.sflag [#allocation3], %s570
        %s572 = sand.u32 %s44, 1
        %s573 = smul.addr %s572, 8
        %s574 = scalar_lea.vmem [#allocation2], %s573
        %p575 = pneg %p57
        %p576 = pneg %p54
        %p577 = pneg %p78
        %p578 = pneg %p75
        %p579 = pneg %p99
        %p580 = pneg %p96
        %p581 = pneg %p120
        %p582 = pneg %p117
        %p583 = pneg %p141
        %p584 = pneg %p138
        %p585 = pneg %p162
        %p586 = pneg %p159
        %p587 = pneg %p183
        %p588 = pneg %p180
        %p589 = pneg %p204
        %p590 = pneg %p201
        %p591 = pneg %p225
        %p592 = pneg %p222
        %p593 = pneg %p246
        %p594 = pneg %p243
        %p595 = pneg %p267
        %p596 = pneg %p264
        %p597 = pneg %p288
        %p598 = pneg %p285
        %p599 = pneg %p309
        %p600 = pneg %p306
        %p601 = pneg %p330
        %p602 = pneg %p327
        %p603 = pneg %p351
        %p604 = pneg %p348
        %p605 = pneg %p377
        %p606 = pneg %p374
        %s607 = sand.u32 %s364, 1
        %s608 = scalar_lea.sflag [#allocation4], %s607
        %s609 = sand.u32 %s364, 1
        %s610 = smul.addr %s609, 8
        %s611 = scalar_lea.vmem [#allocation16], %s610
        %v613 = vld [vmem:[%s537] sm:$0xff]
        %v614 = vpack.c.bf16 %v613, %v613
        %v615 = vld [vmem:[#allocation5] sm:$0xf]
        %v616 = vld [vmem:[#allocation5 + $0x4] sm:$0xf]
        %v617 = vld [vmem:[#allocation5 + $0x8] sm:$0xf]
        %v618 = vld [vmem:[#allocation5 + $0xc] sm:$0xf]
        %v619 = vld [vmem:[#allocation5 + $0x10] sm:$0xf]
        %v620 = vld [vmem:[#allocation5 + $0x14] sm:$0xf]
        %v621 = vld [vmem:[#allocation5 + $0x18] sm:$0xf]
        %v622 = vld [vmem:[#allocation5 + $0x1c] sm:$0xf]
        %v623 = vld [vmem:[#allocation5 + $0x20] sm:$0xf]
        %v624 = vld [vmem:[#allocation5 + $0x24] sm:$0xf]
        %v625 = vld [vmem:[#allocation5 + $0x28] sm:$0xf]
        %v626 = vld [vmem:[#allocation5 + $0x2c] sm:$0xf]
        %v627 = vld [vmem:[#allocation5 + $0x30] sm:$0xf]
        %v628 = vld [vmem:[#allocation5 + $0x34] sm:$0xf]
        %v629 = vld [vmem:[#allocation5 + $0x38] sm:$0xf]
        %v630 = vld [vmem:[#allocation5 + $0x3c] sm:$0xf]
        %v631 = vld [vmem:[%s2] sm:$0x1]
        %v633 = vlaneseq
        %v634 = vshrl.u32 %v633, 7
        %v635 = vsub.s32 0, %v634
        %v636 = vrot.slane %v631, %v635
        %v654 = vunpack.c.l.b16 %v615
        %v655 = vunpack.c.l.b16 %v616
        %v656 = vunpack.c.l.b16 %v617
        %v657 = vunpack.c.l.b16 %v618
        %v658 = vunpack.c.l.b16 %v619
        %v659 = vunpack.c.l.b16 %v620
        %v660 = vunpack.c.l.b16 %v621
        %v661 = vunpack.c.l.b16 %v622
        %v662 = vunpack.c.l.b16 %v623
        %v663 = vunpack.c.l.b16 %v624
        %v664 = vunpack.c.l.b16 %v625
        %v665 = vunpack.c.l.b16 %v626
        %v666 = vunpack.c.l.b16 %v627
        %v667 = vunpack.c.l.b16 %v628
        %v668 = vunpack.c.l.b16 %v629
        %v669 = vunpack.c.l.b16 %v630
        %v670 = vpack.c.b16 %v655, %v654
        %v671 = vpack.c.b16 %v657, %v656
        %v672 = vpack.c.b16 %v659, %v658
        %v673 = vpack.c.b16 %v661, %v660
        %v674 = vpack.c.b16 %v663, %v662
        %v675 = vpack.c.b16 %v665, %v664
        %v676 = vpack.c.b16 %v667, %v666
        %v677 = vpack.c.b16 %v669, %v668
        %686 = vmatprep.subr.bf16.mxu0 0
        %687 = vmatpush1.bf16.msra.mxu0 %v670
        %688 = vmatprep.subr.bf16.mxu0 0
        %689 = vmatpush1.bf16.msra.mxu0 %v671
        %690 = vmatprep.subr.bf16.mxu0 0
        %691 = vmatpush1.bf16.msra.mxu0 %v672
        %692 = vmatprep.subr.bf16.mxu0 0
        %693 = vmatpush1.bf16.msra.mxu0 %v673
        %694 = vmatprep.subr.bf16.mxu0 0
        %695 = vmatpush1.bf16.msra.mxu0 %v674
        %696 = vmatprep.subr.bf16.mxu0 0
        %697 = vmatpush1.bf16.msra.mxu0 %v675
        %698 = vmatprep.subr.bf16.mxu0 0
        %699 = vmatpush1.bf16.msra.mxu0 %v676
        %700 = vmatprep.subr.bf16.mxu0 0
        %701 = vmatpush1.bf16.msra.mxu0 %v677
        %702 = vmatprep.subr.bf16.mxu0 0
        %703 = vmatpush1.bf16.msra.mxu0 0
        %704 = vmatprep.subr.bf16.mxu0 0
        %705 = vmatpush1.bf16.msra.mxu0 0
        %706 = vmatprep.subr.bf16.mxu0 0
        %707 = vmatpush1.bf16.msra.mxu0 0
        %708 = vmatprep.subr.bf16.mxu0 0
        %709 = vmatpush1.bf16.msra.mxu0 0
        %710 = vmatprep.subr.bf16.mxu0 0
        %711 = vmatpush1.bf16.msra.mxu0 0
        %712 = vmatprep.subr.bf16.mxu0 0
        %713 = vmatpush1.bf16.msra.mxu0 0
        %714 = vmatprep.subr.bf16.mxu0 0
        %715 = vmatpush1.bf16.msra.mxu0 0
        %716 = vmatprep.subr.bf16.mxu0 0
        %717 = vmatpush1.bf16.msra.mxu0 0
        %718 = vmatprep.mubr.bf16.mxu0 0
        %719 = vmatmul.mubr.bf16.gmra.mrb[0].mxu0 %v614
        %v720 = vpop.f32.mrb[0].mxu0
        %v721 = vadd.f32 %v636, %v720
        %v722 = vpop.f32.mrb[0].mxu0
        %v723 = vpop.f32.mrb[0].mxu0
        %v724 = vpop.f32.mrb[0].mxu0
        %725 = vdwg.mxu0
        %v726 = vmul.f32 %v721, 0.17677669
        %v727 = vld [vmem:[#allocation7] sm:$0xf]
        %v728 = vld [vmem:[#allocation7 + $0x4] sm:$0xf]
        %v729 = vld [vmem:[#allocation7 + $0x8] sm:$0xf]
        %v730 = vld [vmem:[#allocation7 + $0xc] sm:$0xf]
        %v731 = vld [vmem:[#allocation7 + $0x10] sm:$0xf]
        %v732 = vld [vmem:[#allocation7 + $0x14] sm:$0xf]
        %v733 = vld [vmem:[#allocation7 + $0x18] sm:$0xf]
        %v734 = vld [vmem:[#allocation7 + $0x1c] sm:$0xf]
        %v735 = vld [vmem:[#allocation7 + $0x20] sm:$0xf]
        %v736 = vld [vmem:[#allocation7 + $0x24] sm:$0xf]
        %v737 = vld [vmem:[#allocation7 + $0x28] sm:$0xf]
        %v738 = vld [vmem:[#allocation7 + $0x2c] sm:$0xf]
        %v739 = vld [vmem:[#allocation7 + $0x30] sm:$0xf]
        %v740 = vld [vmem:[#allocation7 + $0x34] sm:$0xf]
        %v741 = vld [vmem:[#allocation7 + $0x38] sm:$0xf]
        %v742 = vld [vmem:[#allocation7 + $0x3c] sm:$0xf]
        %v743 = vld [vmem:[%s4] sm:$0x1]
        %v745 = vlaneseq
        %v746 = vshrl.u32 %v745, 7
        %v747 = vsub.s32 0, %v746
        %v748 = vrot.slane %v743, %v747
        %v766 = vunpack.c.l.b16 %v727
        %v767 = vunpack.c.l.b16 %v728
        %v768 = vunpack.c.l.b16 %v729
        %v769 = vunpack.c.l.b16 %v730
        %v770 = vunpack.c.l.b16 %v731
        %v771 = vunpack.c.l.b16 %v732
        %v772 = vunpack.c.l.b16 %v733
        %v773 = vunpack.c.l.b16 %v734
        %v774 = vunpack.c.l.b16 %v735
        %v775 = vunpack.c.l.b16 %v736
        %v776 = vunpack.c.l.b16 %v737
        %v777 = vunpack.c.l.b16 %v738
        %v778 = vunpack.c.l.b16 %v739
        %v779 = vunpack.c.l.b16 %v740
        %v780 = vunpack.c.l.b16 %v741
        %v781 = vunpack.c.l.b16 %v742
        %v782 = vpack.c.b16 %v767, %v766
        %v783 = vpack.c.b16 %v769, %v768
        %v784 = vpack.c.b16 %v771, %v770
        %v785 = vpack.c.b16 %v773, %v772
        %v786 = vpack.c.b16 %v775, %v774
        %v787 = vpack.c.b16 %v777, %v776
        %v788 = vpack.c.b16 %v779, %v778
        %v789 = vpack.c.b16 %v781, %v780
        %798 = vmatprep.subr.bf16.mxu0 0
        %799 = vmatpush1.bf16.msra.mxu0 %v782
        %800 = vmatprep.subr.bf16.mxu0 0
        %801 = vmatpush1.bf16.msra.mxu0 %v783
        %802 = vmatprep.subr.bf16.mxu0 0
        %803 = vmatpush1.bf16.msra.mxu0 %v784
        %804 = vmatprep.subr.bf16.mxu0 0
        %805 = vmatpush1.bf16.msra.mxu0 %v785
        %806 = vmatprep.subr.bf16.mxu0 0
        %807 = vmatpush1.bf16.msra.mxu0 %v786
        %808 = vmatprep.subr.bf16.mxu0 0
        %809 = vmatpush1.bf16.msra.mxu0 %v787
        %810 = vmatprep.subr.bf16.mxu0 0
        %811 = vmatpush1.bf16.msra.mxu0 %v788
        %812 = vmatprep.subr.bf16.mxu0 0
        %813 = vmatpush1.bf16.msra.mxu0 %v789
        %814 = vmatprep.subr.bf16.mxu0 0
        %815 = vmatpush1.bf16.msra.mxu0 0
        %816 = vmatprep.subr.bf16.mxu0 0
        %817 = vmatpush1.bf16.msra.mxu0 0
        %818 = vmatprep.subr.bf16.mxu0 0
        %819 = vmatpush1.bf16.msra.mxu0 0
        %820 = vmatprep.subr.bf16.mxu0 0
        %821 = vmatpush1.bf16.msra.mxu0 0
        %822 = vmatprep.subr.bf16.mxu0 0
        %823 = vmatpush1.bf16.msra.mxu0 0
        %824 = vmatprep.subr.bf16.mxu0 0
        %825 = vmatpush1.bf16.msra.mxu0 0
        %826 = vmatprep.subr.bf16.mxu0 0
        %827 = vmatpush1.bf16.msra.mxu0 0
        %828 = vmatprep.subr.bf16.mxu0 0
        %829 = vmatpush1.bf16.msra.mxu0 0
        %830 = vmatprep.mubr.bf16.mxu0 0
        %831 = vmatmul.mubr.bf16.gmra.mrb[0].mxu0 %v614
        %v832 = vpop.f32.mrb[0].mxu0
        %v833 = vadd.f32 %v748, %v832
        %v834 = vpop.f32.mrb[0].mxu0
        %v835 = vpop.f32.mrb[0].mxu0
        %v836 = vpop.f32.mrb[0].mxu0
        %837 = vdwg.mxu0
        %v838 = vld [vmem:[#allocation8] sm:$0xf]
        %v839 = vld [vmem:[#allocation8 + $0x4] sm:$0xf]
        %v840 = vld [vmem:[#allocation8 + $0x8] sm:$0xf]
        %v841 = vld [vmem:[#allocation8 + $0xc] sm:$0xf]
        %v842 = vld [vmem:[#allocation8 + $0x10] sm:$0xf]
        %v843 = vld [vmem:[#allocation8 + $0x14] sm:$0xf]
        %v844 = vld [vmem:[#allocation8 + $0x18] sm:$0xf]
        %v845 = vld [vmem:[#allocation8 + $0x1c] sm:$0xf]
        %v846 = vld [vmem:[#allocation8 + $0x20] sm:$0xf]
        %v847 = vld [vmem:[#allocation8 + $0x24] sm:$0xf]
        %v848 = vld [vmem:[#allocation8 + $0x28] sm:$0xf]
        %v849 = vld [vmem:[#allocation8 + $0x2c] sm:$0xf]
        %v850 = vld [vmem:[#allocation8 + $0x30] sm:$0xf]
        %v851 = vld [vmem:[#allocation8 + $0x34] sm:$0xf]
        %v852 = vld [vmem:[#allocation8 + $0x38] sm:$0xf]
        %v853 = vld [vmem:[#allocation8 + $0x3c] sm:$0xf]
        %v854 = vld [vmem:[%s6] sm:$0x1]
        %v856 = vlaneseq
        %v857 = vshrl.u32 %v856, 7
        %v858 = vsub.s32 0, %v857
        %v859 = vrot.slane %v854, %v858
        %v877 = vunpack.c.l.b16 %v838
        %v878 = vunpack.c.l.b16 %v839
        %v879 = vunpack.c.l.b16 %v840
        %v880 = vunpack.c.l.b16 %v841
        %v881 = vunpack.c.l.b16 %v842
        %v882 = vunpack.c.l.b16 %v843
        %v883 = vunpack.c.l.b16 %v844
        %v884 = vunpack.c.l.b16 %v845
        %v885 = vunpack.c.l.b16 %v846
        %v886 = vunpack.c.l.b16 %v847
        %v887 = vunpack.c.l.b16 %v848
        %v888 = vunpack.c.l.b16 %v849
        %v889 = vunpack.c.l.b16 %v850
        %v890 = vunpack.c.l.b16 %v851
        %v891 = vunpack.c.l.b16 %v852
        %v892 = vunpack.c.l.b16 %v853
        %v893 = vpack.c.b16 %v878, %v877
        %v894 = vpack.c.b16 %v880, %v879
        %v895 = vpack.c.b16 %v882, %v881
        %v896 = vpack.c.b16 %v884, %v883
        %v897 = vpack.c.b16 %v886, %v885
        %v898 = vpack.c.b16 %v888, %v887
        %v899 = vpack.c.b16 %v890, %v889
        %v900 = vpack.c.b16 %v892, %v891
        %909 = vmatprep.subr.bf16.mxu0 0
        %910 = vmatpush1.bf16.msra.mxu0 %v893
        %911 = vmatprep.subr.bf16.mxu0 0
        %912 = vmatpush1.bf16.msra.mxu0 %v894
        %913 = vmatprep.subr.bf16.mxu0 0
        %914 = vmatpush1.bf16.msra.mxu0 %v895
        %915 = vmatprep.subr.bf16.mxu0 0
        %916 = vmatpush1.bf16.msra.mxu0 %v896
        %917 = vmatprep.subr.bf16.mxu0 0
        %918 = vmatpush1.bf16.msra.mxu0 %v897
        %919 = vmatprep.subr.bf16.mxu0 0
        %920 = vmatpush1.bf16.msra.mxu0 %v898
        %921 = vmatprep.subr.bf16.mxu0 0
        %922 = vmatpush1.bf16.msra.mxu0 %v899
        %923 = vmatprep.subr.bf16.mxu0 0
        %924 = vmatpush1.bf16.msra.mxu0 %v900
        %925 = vmatprep.subr.bf16.mxu0 0
        %926 = vmatpush1.bf16.msra.mxu0 0
        %927 = vmatprep.subr.bf16.mxu0 0
        %928 = vmatpush1.bf16.msra.mxu0 0
        %929 = vmatprep.subr.bf16.mxu0 0
        %930 = vmatpush1.bf16.msra.mxu0 0
        %931 = vmatprep.subr.bf16.mxu0 0
        %932 = vmatpush1.bf16.msra.mxu0 0
        %933 = vmatprep.subr.bf16.mxu0 0
        %934 = vmatpush1.bf16.msra.mxu0 0
        %935 = vmatprep.subr.bf16.mxu0 0
        %936 = vmatpush1.bf16.msra.mxu0 0
        %937 = vmatprep.subr.bf16.mxu0 0
        %938 = vmatpush1.bf16.msra.mxu0 0
        %939 = vmatprep.subr.bf16.mxu0 0
        %940 = vmatpush1.bf16.msra.mxu0 0
        %941 = vmatprep.mubr.bf16.mxu0 0
        %942 = vmatmul.mubr.bf16.gmra.mrb[0].mxu0 %v614
        %v943 = vpop.f32.mrb[0].mxu0
        %v944 = vadd.f32 %v859, %v943
        %v945 = vpop.f32.mrb[0].mxu0
        %v946 = vpop.f32.mrb[0].mxu0
        %v947 = vpop.f32.mrb[0].mxu0
        %948 = vdwg.mxu0
        %v949 = vpack.c.bf16 %v726, %v726
        %v950 = vpack.c.bf16 %v833, %v833
        %v951 = vpack.c.bf16 %v944, %v944
        %v952 = vlaneseq
        %v953 = vshrl.u32 %v952, 7
        %v954 = vlaneseq
        %v955 = vand.u32 %v954, 127
        %vm956 = vcmp.ge.s32.totalorder %v953, %v955
        %v957 = vsel %vm956, 0.0, -1e+30
        %v958 = vld [vmem:[#allocation10] sm:$0xf]
        %v959 = vld [vmem:[#allocation10 + $0x4] sm:$0xf]
        %v960 = vld [vmem:[#allocation10 + $0x8] sm:$0xf]
        %v961 = vld [vmem:[#allocation10 + $0xc] sm:$0xf]
        %v962 = vld [vmem:[#allocation10 + $0x10] sm:$0xf]
        %v963 = vld [vmem:[#allocation10 + $0x14] sm:$0xf]
        %v964 = vld [vmem:[#allocation10 + $0x18] sm:$0xf]
        %v965 = vld [vmem:[#allocation10 + $0x1c] sm:$0xf]
        %v966 = vld [vmem:[#allocation10 + $0x20] sm:$0xf]
        %v967 = vld [vmem:[#allocation10 + $0x24] sm:$0xf]
        %v968 = vld [vmem:[#allocation10 + $0x28] sm:$0xf]
        %v969 = vld [vmem:[#allocation10 + $0x2c] sm:$0xf]
        %v970 = vld [vmem:[#allocation10 + $0x30] sm:$0xf]
        %v971 = vld [vmem:[#allocation10 + $0x34] sm:$0xf]
        %v972 = vld [vmem:[#allocation10 + $0x38] sm:$0xf]
        %v973 = vld [vmem:[#allocation10 + $0x3c] sm:$0xf]
        %vm974 = vcmask 261120
        %v976 = vsel %vm974, %v949, 0
        %v979 = vsel %vm974, %v950, 0
        %981 = vmatprep.subr.bf16.mxu0 0
        %982 = vmatpush1.bf16.xpose.msra.mxu0 %v979
        %983 = vmatprep.subr.bf16.mxu0 0
        %984 = vmatpush1.bf16.xpose.msra.mxu0 0
        %985 = vmatprep.subr.bf16.mxu0 0
        %986 = vmatpush1.bf16.xpose.msra.mxu0 0
        %987 = vmatprep.subr.bf16.mxu0 0
        %988 = vmatpush1.bf16.xpose.msra.mxu0 0
        %989 = vmatprep.subr.bf16.mxu0 0
        %990 = vmatpush1.bf16.xpose.msra.mxu0 0
        %991 = vmatprep.subr.bf16.mxu0 0
        %992 = vmatpush1.bf16.xpose.msra.mxu0 0
        %993 = vmatprep.subr.bf16.mxu0 0
        %994 = vmatpush1.bf16.xpose.msra.mxu0 0
        %995 = vmatprep.subr.bf16.mxu0 0
        %996 = vmatpush1.bf16.xpose.msra.mxu0 0
        %997 = vmatprep.subr.bf16.mxu0 0
        %998 = vmatpush1.bf16.xpose.msra.mxu0 0
        %999 = vmatprep.subr.bf16.mxu0 0
        %1000 = vmatpush1.bf16.xpose.msra.mxu0 0
        %1001 = vmatprep.subr.bf16.mxu0 0
        %1002 = vmatpush1.bf16.xpose.msra.mxu0 0
        %1003 = vmatprep.subr.bf16.mxu0 0
        %1004 = vmatpush1.bf16.xpose.msra.mxu0 0
        %1005 = vmatprep.subr.bf16.mxu0 0
        %1006 = vmatpush1.bf16.xpose.msra.mxu0 0
        %1007 = vmatprep.subr.bf16.mxu0 0
        %1008 = vmatpush1.bf16.xpose.msra.mxu0 0
        %1009 = vmatprep.subr.bf16.mxu0 0
        %1010 = vmatpush1.bf16.xpose.msra.mxu0 0
        %1011 = vmatprep.subr.bf16.mxu0 0
        %1012 = vmatpush1.bf16.xpose.msra.mxu0 0
        %1013 = vmatprep.mubr.bf16.mxu0 0
        %1014 = vmatmul.mubr.bf16.gmra.mrb[0].mxu0 %v976
        %v1015 = vpop.f32.mrb[0].mxu0
        %v1016 = vadd.f32 %v957, %v1015
        %v1017 = vpop.f32.mrb[0].mxu0
        %v1018 = vpop.f32.mrb[0].mxu0
        %v1019 = vpop.f32.mrb[0].mxu0
        %1020 = vdwg.mxu0
        %vm1021 = vcmask 64512
        %v1022 = vsel %vm1021, %v1016, -inf
        %1023 = vmax.xlane.f32.xlu0 %v1022
        %v1024 = vpop.xlane.xlu0 %1023
        %v1025 = vsub.f32 %v1016, %v1024
        %v1026 = vmul.f32 %v1025, 1.442695
        %v1027 = vpow.pop %v1026
        %v1028 = vsel %vm1021, %v1027, 0.0
        %1029 = vadd.xlane.f32.xlu0 %v1028
        %v1030 = vpop.xlane.xlu0 %1029
        %v1031 = vrcp.pop %v1030
        %v1032 = vmul.f32 %v1027, %v1031
        %v1033 = vpack.c.bf16 %v1032, %v1032
        %v1035 = vsel %vm1021, %v1033, 0
        %vm1037 = vcmask 1043456
        %v1039 = vsel %vm1037, %v951, 0
        %1041 = vmatprep.subr.bf16.mxu0 0
        %1042 = vmatpush1.bf16.msra.mxu0 %v1039
        %1043 = vmatprep.subr.bf16.mxu0 0
        %1044 = vmatpush1.bf16.msra.mxu0 0
        %1045 = vmatprep.subr.bf16.mxu0 0
        %1046 = vmatpush1.bf16.msra.mxu0 0
        %1047 = vmatprep.subr.bf16.mxu0 0
        %1048 = vmatpush1.bf16.msra.mxu0 0
        %1049 = vmatprep.subr.bf16.mxu0 0
        %1050 = vmatpush1.bf16.msra.mxu0 0
        %1051 = vmatprep.subr.bf16.mxu0 0
        %1052 = vmatpush1.bf16.msra.mxu0 0
        %1053 = vmatprep.subr.bf16.mxu0 0
        %1054 = vmatpush1.bf16.msra.mxu0 0
        %1055 = vmatprep.subr.bf16.mxu0 0
        %1056 = vmatpush1.bf16.msra.mxu0 0
        %1057 = vmatprep.subr.bf16.mxu0 0
        %1058 = vmatpush1.bf16.msra.mxu0 0
        %1059 = vmatprep.subr.bf16.mxu0 0
        %1060 = vmatpush1.bf16.msra.mxu0 0
        %1061 = vmatprep.subr.bf16.mxu0 0
        %1062 = vmatpush1.bf16.msra.mxu0 0
        %1063 = vmatprep.subr.bf16.mxu0 0
        %1064 = vmatpush1.bf16.msra.mxu0 0
        %1065 = vmatprep.subr.bf16.mxu0 0
        %1066 = vmatpush1.bf16.msra.mxu0 0
        %1067 = vmatprep.subr.bf16.mxu0 0
        %1068 = vmatpush1.bf16.msra.mxu0 0
        %1069 = vmatprep.subr.bf16.mxu0 0
        %1070 = vmatpush1.bf16.msra.mxu0 0
        %1071 = vmatprep.subr.bf16.mxu0 0
        %1072 = vmatpush1.bf16.msra.mxu0 0
        %1073 = vmatprep.mubr.bf16.mxu0 0
        %1074 = vmatmul.mubr.bf16.gmra.mrb[0].mxu0 %v1035
        %v1075 = vpop.f32.mrb[0].mxu0
        %v1076 = vadd.f32 0.0, %v1075
        %v1077 = vpop.f32.mrb[0].mxu0
        %v1078 = vpop.f32.mrb[0].mxu0
        %v1079 = vpop.f32.mrb[0].mxu0
        %1080 = vdwg.mxu0
        %v1081 = vpack.c.bf16 %v1076, %v1076
        %1083 = vrot.lane.b32.xlu0 %v949, 96
        %v1084 = vpop.permute.xlu0 %1083
        %1086 = vrot.lane.b32.xlu0 %v950, 96
        %v1087 = vpop.permute.xlu0 %1086
        %v1089 = vsel %vm974, %v1084, 0
        %v1092 = vsel %vm974, %v1087, 0
        %1094 = vmatprep.subr.bf16.mxu0 0
        %1095 = vmatpush1.bf16.xpose.msra.mxu0 %v1092
        %1096 = vmatprep.subr.bf16.mxu0 0
        %1097 = vmatpush1.bf16.xpose.msra.mxu0 0
        %1098 = vmatprep.subr.bf16.mxu0 0
        %1099 = vmatpush1.bf16.xpose.msra.mxu0 0
        %1100 = vmatprep.subr.bf16.mxu0 0
        %1101 = vmatpush1.bf16.xpose.msra.mxu0 0
        %1102 = vmatprep.subr.bf16.mxu0 0
        %1103 = vmatpush1.bf16.xpose.msra.mxu0 0
        %1104 = vmatprep.subr.bf16.mxu0 0
        %1105 = vmatpush1.bf16.xpose.msra.mxu0 0
        %1106 = vmatprep.subr.bf16.mxu0 0
        %1107 = vmatpush1.bf16.xpose.msra.mxu0 0
        %1108 = vmatprep.subr.bf16.mxu0 0
        %1109 = vmatpush1.bf16.xpose.msra.mxu0 0
        %1110 = vmatprep.subr.bf16.mxu0 0
        %1111 = vmatpush1.bf16.xpose.msra.mxu0 0
        %1112 = vmatprep.subr.bf16.mxu0 0
        %1113 = vmatpush1.bf16.xpose.msra.mxu0 0
        %1114 = vmatprep.subr.bf16.mxu0 0
        %1115 = vmatpush1.bf16.xpose.msra.mxu0 0
        %1116 = vmatprep.subr.bf16.mxu0 0
        %1117 = vmatpush1.bf16.xpose.msra.mxu0 0
        %1118 = vmatprep.subr.bf16.mxu0 0
        %1119 = vmatpush1.bf16.xpose.msra.mxu0 0
        %1120 = vmatprep.subr.bf16.mxu0 0
        %1121 = vmatpush1.bf16.xpose.msra.mxu0 0
        %1122 = vmatprep.subr.bf16.mxu0 0
        %1123 = vmatpush1.bf16.xpose.msra.mxu0 0
        %1124 = vmatprep.subr.bf16.mxu0 0
        %1125 = vmatpush1.bf16.xpose.msra.mxu0 0
        %1126 = vmatprep.mubr.bf16.mxu0 0
        %1127 = vmatmul.mubr.bf16.gmra.mrb[0].mxu0 %v1089
        %v1128 = vpop.f32.mrb[0].mxu0
        %v1129 = vadd.f32 %v957, %v1128
        %v1130 = vpop.f32.mrb[0].mxu0
        %v1131 = vpop.f32.mrb[0].mxu0
        %v1132 = vpop.f32.mrb[0].mxu0
        %1133 = vdwg.mxu0
        %v1134 = vsel %vm1021, %v1129, -inf
        %1135 = vmax.xlane.f32.xlu0 %v1134
        %v1136 = vpop.xlane.xlu0 %1135
        %v1137 = vsub.f32 %v1129, %v1136
        %v1138 = vmul.f32 %v1137, 1.442695
        %v1139 = vpow.pop %v1138
        %v1140 = vsel %vm1021, %v1139, 0.0
        %1141 = vadd.xlane.f32.xlu0 %v1140
        %v1142 = vpop.xlane.xlu0 %1141
        %v1143 = vrcp.pop %v1142
        %v1144 = vmul.f32 %v1139, %v1143
        %v1145 = vpack.c.bf16 %v1144, %v1144
        %1147 = vrot.lane.b32.xlu0 %v951, 96
        %v1148 = vpop.permute.xlu0 %1147
        %v1150 = vsel %vm1021, %v1145, 0
        %v1153 = vsel %vm1037, %v1148, 0
        %1155 = vmatprep.subr.bf16.mxu0 0
        %1156 = vmatpush1.bf16.msra.mxu0 %v1153
        %1157 = vmatprep.subr.bf16.mxu0 0
        %1158 = vmatpush1.bf16.msra.mxu0 0
        %1159 = vmatprep.subr.bf16.mxu0 0
        %1160 = vmatpush1.bf16.msra.mxu0 0
        %1161 = vmatprep.subr.bf16.mxu0 0
        %1162 = vmatpush1.bf16.msra.mxu0 0
        %1163 = vmatprep.subr.bf16.mxu0 0
        %1164 = vmatpush1.bf16.msra.mxu0 0
        %1165 = vmatprep.subr.bf16.mxu0 0
        %1166 = vmatpush1.bf16.msra.mxu0 0
        %1167 = vmatprep.subr.bf16.mxu0 0
        %1168 = vmatpush1.bf16.msra.mxu0 0
        %1169 = vmatprep.subr.bf16.mxu0 0
        %1170 = vmatpush1.bf16.msra.mxu0 0
        %1171 = vmatprep.subr.bf16.mxu0 0
        %1172 = vmatpush1.bf16.msra.mxu0 0
        %1173 = vmatprep.subr.bf16.mxu0 0
        %1174 = vmatpush1.bf16.msra.mxu0 0
        %1175 = vmatprep.subr.bf16.mxu0 0
        %1176 = vmatpush1.bf16.msra.mxu0 0
        %1177 = vmatprep.subr.bf16.mxu0 0
        %1178 = vmatpush1.bf16.msra.mxu0 0
        %1179 = vmatprep.subr.bf16.mxu0 0
        %1180 = vmatpush1.bf16.msra.mxu0 0
        %1181 = vmatprep.subr.bf16.mxu0 0
        %1182 = vmatpush1.bf16.msra.mxu0 0
        %1183 = vmatprep.subr.bf16.mxu0 0
        %1184 = vmatpush1.bf16.msra.mxu0 0
        %1185 = vmatprep.subr.bf16.mxu0 0
        %1186 = vmatpush1.bf16.msra.mxu0 0
        %1187 = vmatprep.mubr.bf16.mxu0 0
        %1188 = vmatmul.mubr.bf16.gmra.mrb[0].mxu0 %v1150
        %v1189 = vpop.f32.mrb[0].mxu0
        %v1190 = vadd.f32 0.0, %v1189
        %v1191 = vpop.f32.mrb[0].mxu0
        %v1192 = vpop.f32.mrb[0].mxu0
        %v1193 = vpop.f32.mrb[0].mxu0
        %1194 = vdwg.mxu0
        %v1195 = vpack.c.bf16 %v1190, %v1190
        %v1200 = vunpack.c.l.b16 %v962
        %v1201 = vunpack.c.l.b16 %v963
        %v1202 = vunpack.c.l.b16 %v964
        %v1203 = vunpack.c.l.b16 %v965
        %v1204 = vpack.c.b16 %v1201, %v1200
        %v1205 = vpack.c.b16 %v1203, %v1202
        %v1209 = vsel %vm974, %v1195, 0
        %1211 = vmatprep.subr.bf16.mxu0 0
        %1212 = vmatpush1.bf16.msra.mxu0 %v1204
        %1213 = vmatprep.subr.bf16.mxu0 0
        %1214 = vmatpush1.bf16.msra.mxu0 %v1205
        %1215 = vmatprep.subr.bf16.mxu0 0
        %1216 = vmatpush1.bf16.msra.mxu0 0
        %1217 = vmatprep.subr.bf16.mxu0 0
        %1218 = vmatpush1.bf16.msra.mxu0 0
        %1219 = vmatprep.subr.bf16.mxu0 0
        %1220 = vmatpush1.bf16.msra.mxu0 0
        %1221 = vmatprep.subr.bf16.mxu0 0
        %1222 = vmatpush1.bf16.msra.mxu0 0
        %1223 = vmatprep.subr.bf16.mxu0 0
        %1224 = vmatpush1.bf16.msra.mxu0 0
        %1225 = vmatprep.subr.bf16.mxu0 0
        %1226 = vmatpush1.bf16.msra.mxu0 0
        %1227 = vmatprep.subr.bf16.mxu0 0
        %1228 = vmatpush1.bf16.msra.mxu0 0
        %1229 = vmatprep.subr.bf16.mxu0 0
        %1230 = vmatpush1.bf16.msra.mxu0 0
        %1231 = vmatprep.subr.bf16.mxu0 0
        %1232 = vmatpush1.bf16.msra.mxu0 0
        %1233 = vmatprep.subr.bf16.mxu0 0
        %1234 = vmatpush1.bf16.msra.mxu0 0
        %1235 = vmatprep.subr.bf16.mxu0 0
        %1236 = vmatpush1.bf16.msra.mxu0 0
        %1237 = vmatprep.subr.bf16.mxu0 0
        %1238 = vmatpush1.bf16.msra.mxu0 0
        %1239 = vmatprep.subr.bf16.mxu0 0
        %1240 = vmatpush1.bf16.msra.mxu0 0
        %1241 = vmatprep.subr.bf16.mxu0 0
        %1242 = vmatpush1.bf16.msra.mxu0 0
        %1243 = vmatprep.mubr.bf16.mxu0 0
        %1244 = vmatmul.mubr.bf16.gmra.mrb[0].mxu0 %v1209
        %v1245 = vpop.f32.mrb[0].mxu0
        %v1246 = vadd.f32 0.0, %v1245
        %v1247 = vpop.f32.mrb[0].mxu0
        %v1248 = vpop.f32.mrb[0].mxu0
        %v1249 = vpop.f32.mrb[0].mxu0
        %1250 = vdwg.mxu0
        %v1255 = vunpack.c.l.b16 %v958
        %v1256 = vunpack.c.l.b16 %v959
        %v1257 = vunpack.c.l.b16 %v960
        %v1258 = vunpack.c.l.b16 %v961
        %v1259 = vpack.c.b16 %v1256, %v1255
        %v1260 = vpack.c.b16 %v1258, %v1257
        %v1264 = vsel %vm974, %v1081, 0
        %1266 = vmatprep.subr.bf16.mxu0 0
        %1267 = vmatpush1.bf16.msra.mxu0 %v1259
        %1268 = vmatprep.subr.bf16.mxu0 0
        %1269 = vmatpush1.bf16.msra.mxu0 %v1260
        %1270 = vmatprep.subr.bf16.mxu0 0
        %1271 = vmatpush1.bf16.msra.mxu0 0
        %1272 = vmatprep.subr.bf16.mxu0 0
        %1273 = vmatpush1.bf16.msra.mxu0 0
        %1274 = vmatprep.subr.bf16.mxu0 0
        %1275 = vmatpush1.bf16.msra.mxu0 0
        %1276 = vmatprep.subr.bf16.mxu0 0
        %1277 = vmatpush1.bf16.msra.mxu0 0
        %1278 = vmatprep.subr.bf16.mxu0 0
        %1279 = vmatpush1.bf16.msra.mxu0 0
        %1280 = vmatprep.subr.bf16.mxu0 0
        %1281 = vmatpush1.bf16.msra.mxu0 0
        %1282 = vmatprep.subr.bf16.mxu0 0
        %1283 = vmatpush1.bf16.msra.mxu0 0
        %1284 = vmatprep.subr.bf16.mxu0 0
        %1285 = vmatpush1.bf16.msra.mxu0 0
        %1286 = vmatprep.subr.bf16.mxu0 0
        %1287 = vmatpush1.bf16.msra.mxu0 0
        %1288 = vmatprep.subr.bf16.mxu0 0
        %1289 = vmatpush1.bf16.msra.mxu0 0
        %1290 = vmatprep.subr.bf16.mxu0 0
        %1291 = vmatpush1.bf16.msra.mxu0 0
        %1292 = vmatprep.subr.bf16.mxu0 0
        %1293 = vmatpush1.bf16.msra.mxu0 0
        %1294 = vmatprep.subr.bf16.mxu0 0
        %1295 = vmatpush1.bf16.msra.mxu0 0
        %1296 = vmatprep.subr.bf16.mxu0 0
        %1297 = vmatpush1.bf16.msra.mxu0 0
        %1298 = vmatprep.mubr.bf16.mxu0 0
        %1299 = vmatmul.mubr.bf16.gmra.mrb[0].mxu0 %v1264
        %v1300 = vpop.f32.mrb[0].mxu0
        %v1301 = vadd.f32 %v1246, %v1300
        %v1302 = vpop.f32.mrb[0].mxu0
        %v1303 = vpop.f32.mrb[0].mxu0
        %v1304 = vpop.f32.mrb[0].mxu0
        %1305 = vdwg.mxu0
        %1306 = vrot.lane.b32.xlu0 %v949, 64
        %v1307 = vpop.permute.xlu0 %1306
        %1308 = vrot.lane.b32.xlu0 %v950, 64
        %v1309 = vpop.permute.xlu0 %1308
        %v1311 = vsel %vm974, %v1307, 0
        %v1314 = vsel %vm974, %v1309, 0
        %1316 = vmatprep.subr.bf16.mxu0 0
        %1317 = vmatpush1.bf16.xpose.msra.mxu0 %v1314
        %1318 = vmatprep.subr.bf16.mxu0 0
        %1319 = vmatpush1.bf16.xpose.msra.mxu0 0
        %1320 = vmatprep.subr.bf16.mxu0 0
        %1321 = vmatpush1.bf16.xpose.msra.mxu0 0
        %1322 = vmatprep.subr.bf16.mxu0 0
        %1323 = vmatpush1.bf16.xpose.msra.mxu0 0
        %1324 = vmatprep.subr.bf16.mxu0 0
        %1325 = vmatpush1.bf16.xpose.msra.mxu0 0
        %1326 = vmatprep.subr.bf16.mxu0 0
        %1327 = vmatpush1.bf16.xpose.msra.mxu0 0
        %1328 = vmatprep.subr.bf16.mxu0 0
        %1329 = vmatpush1.bf16.xpose.msra.mxu0 0
        %1330 = vmatprep.subr.bf16.mxu0 0
        %1331 = vmatpush1.bf16.xpose.msra.mxu0 0
        %1332 = vmatprep.subr.bf16.mxu0 0
        %1333 = vmatpush1.bf16.xpose.msra.mxu0 0
        %1334 = vmatprep.subr.bf16.mxu0 0
        %1335 = vmatpush1.bf16.xpose.msra.mxu0 0
        %1336 = vmatprep.subr.bf16.mxu0 0
        %1337 = vmatpush1.bf16.xpose.msra.mxu0 0
        %1338 = vmatprep.subr.bf16.mxu0 0
        %1339 = vmatpush1.bf16.xpose.msra.mxu0 0
        %1340 = vmatprep.subr.bf16.mxu0 0
        %1341 = vmatpush1.bf16.xpose.msra.mxu0 0
        %1342 = vmatprep.subr.bf16.mxu0 0
        %1343 = vmatpush1.bf16.xpose.msra.mxu0 0
        %1344 = vmatprep.subr.bf16.mxu0 0
        %1345 = vmatpush1.bf16.xpose.msra.mxu0 0
        %1346 = vmatprep.subr.bf16.mxu0 0
        %1347 = vmatpush1.bf16.xpose.msra.mxu0 0
        %1348 = vmatprep.mubr.bf16.mxu0 0
        %1349 = vmatmul.mubr.bf16.gmra.mrb[0].mxu0 %v1311
        %v1350 = vpop.f32.mrb[0].mxu0
        %v1351 = vadd.f32 %v957, %v1350
        %v1352 = vpop.f32.mrb[0].mxu0
        %v1353 = vpop.f32.mrb[0].mxu0
        %v1354 = vpop.f32.mrb[0].mxu0
        %1355 = vdwg.mxu0
        %v1356 = vsel %vm1021, %v1351, -inf
        %1357 = vmax.xlane.f32.xlu0 %v1356
        %v1358 = vpop.xlane.xlu0 %1357
        %v1359 = vsub.f32 %v1351, %v1358
        %v1360 = vmul.f32 %v1359, 1.442695
        %v1361 = vpow.pop %v1360
        %v1362 = vsel %vm1021, %v1361, 0.0
        %1363 = vadd.xlane.f32.xlu0 %v1362
        %v1364 = vpop.xlane.xlu0 %1363
        %v1365 = vrcp.pop %v1364
        %v1366 = vmul.f32 %v1361, %v1365
        %v1367 = vpack.c.bf16 %v1366, %v1366
        %1368 = vrot.lane.b32.xlu0 %v951, 64
        %v1369 = vpop.permute.xlu0 %1368
        %v1371 = vsel %vm1021, %v1367, 0
        %v1374 = vsel %vm1037, %v1369, 0
        %1376 = vmatprep.subr.bf16.mxu0 0
        %1377 = vmatpush1.bf16.msra.mxu0 %v1374
        %1378 = vmatprep.subr.bf16.mxu0 0
        %1379 = vmatpush1.bf16.msra.mxu0 0
        %1380 = vmatprep.subr.bf16.mxu0 0
        %1381 = vmatpush1.bf16.msra.mxu0 0
        %1382 = vmatprep.subr.bf16.mxu0 0
        %1383 = vmatpush1.bf16.msra.mxu0 0
        %1384 = vmatprep.subr.bf16.mxu0 0
        %1385 = vmatpush1.bf16.msra.mxu0 0
        %1386 = vmatprep.subr.bf16.mxu0 0
        %1387 = vmatpush1.bf16.msra.mxu0 0
        %1388 = vmatprep.subr.bf16.mxu0 0
        %1389 = vmatpush1.bf16.msra.mxu0 0
        %1390 = vmatprep.subr.bf16.mxu0 0
        %1391 = vmatpush1.bf16.msra.mxu0 0
        %1392 = vmatprep.subr.bf16.mxu0 0
        %1393 = vmatpush1.bf16.msra.mxu0 0
        %1394 = vmatprep.subr.bf16.mxu0 0
        %1395 = vmatpush1.bf16.msra.mxu0 0
        %1396 = vmatprep.subr.bf16.mxu0 0
        %1397 = vmatpush1.bf16.msra.mxu0 0
        %1398 = vmatprep.subr.bf16.mxu0 0
        %1399 = vmatpush1.bf16.msra.mxu0 0
        %1400 = vmatprep.subr.bf16.mxu0 0
        %1401 = vmatpush1.bf16.msra.mxu0 0
        %1402 = vmatprep.subr.bf16.mxu0 0
        %1403 = vmatpush1.bf16.msra.mxu0 0
        %1404 = vmatprep.subr.bf16.mxu0 0
        %1405 = vmatpush1.bf16.msra.mxu0 0
        %1406 = vmatprep.subr.bf16.mxu0 0
        %1407 = vmatpush1.bf16.msra.mxu0 0
        %1408 = vmatprep.mubr.bf16.mxu0 0
        %1409 = vmatmul.mubr.bf16.gmra.mrb[0].mxu0 %v1371
        %v1410 = vpop.f32.mrb[0].mxu0
        %v1411 = vadd.f32 0.0, %v1410
        %v1412 = vpop.f32.mrb[0].mxu0
        %v1413 = vpop.f32.mrb[0].mxu0
        %v1414 = vpop.f32.mrb[0].mxu0
        %1415 = vdwg.mxu0
        %v1416 = vpack.c.bf16 %v1411, %v1411
        %v1421 = vunpack.c.l.b16 %v966
        %v1422 = vunpack.c.l.b16 %v967
        %v1423 = vunpack.c.l.b16 %v968
        %v1424 = vunpack.c.l.b16 %v969
        %v1425 = vpack.c.b16 %v1422, %v1421
        %v1426 = vpack.c.b16 %v1424, %v1423
        %v1430 = vsel %vm974, %v1416, 0
        %1432 = vmatprep.subr.bf16.mxu0 0
        %1433 = vmatpush1.bf16.msra.mxu0 %v1425
        %1434 = vmatprep.subr.bf16.mxu0 0
        %1435 = vmatpush1.bf16.msra.mxu0 %v1426
        %1436 = vmatprep.subr.bf16.mxu0 0
        %1437 = vmatpush1.bf16.msra.mxu0 0
        %1438 = vmatprep.subr.bf16.mxu0 0
        %1439 = vmatpush1.bf16.msra.mxu0 0
        %1440 = vmatprep.subr.bf16.mxu0 0
        %1441 = vmatpush1.bf16.msra.mxu0 0
        %1442 = vmatprep.subr.bf16.mxu0 0
        %1443 = vmatpush1.bf16.msra.mxu0 0
        %1444 = vmatprep.subr.bf16.mxu0 0
        %1445 = vmatpush1.bf16.msra.mxu0 0
        %1446 = vmatprep.subr.bf16.mxu0 0
        %1447 = vmatpush1.bf16.msra.mxu0 0
        %1448 = vmatprep.subr.bf16.mxu0 0
        %1449 = vmatpush1.bf16.msra.mxu0 0
        %1450 = vmatprep.subr.bf16.mxu0 0
        %1451 = vmatpush1.bf16.msra.mxu0 0
        %1452 = vmatprep.subr.bf16.mxu0 0
        %1453 = vmatpush1.bf16.msra.mxu0 0
        %1454 = vmatprep.subr.bf16.mxu0 0
        %1455 = vmatpush1.bf16.msra.mxu0 0
        %1456 = vmatprep.subr.bf16.mxu0 0
        %1457 = vmatpush1.bf16.msra.mxu0 0
        %1458 = vmatprep.subr.bf16.mxu0 0
        %1459 = vmatpush1.bf16.msra.mxu0 0
        %1460 = vmatprep.subr.bf16.mxu0 0
        %1461 = vmatpush1.bf16.msra.mxu0 0
        %1462 = vmatprep.subr.bf16.mxu0 0
        %1463 = vmatpush1.bf16.msra.mxu0 0
        %1464 = vmatprep.mubr.bf16.mxu0 0
        %1465 = vmatmul.mubr.bf16.gmra.mrb[0].mxu0 %v1430
        %v1466 = vpop.f32.mrb[0].mxu0
        %v1467 = vadd.f32 0.0, %v1466
        %v1468 = vpop.f32.mrb[0].mxu0
        %v1469 = vpop.f32.mrb[0].mxu0
        %v1470 = vpop.f32.mrb[0].mxu0
        %1471 = vdwg.mxu0
        %v1472 = vadd.f32 %v1301, %v1467
        %1473 = vrot.lane.b32.xlu0 %v949, 32
        %v1474 = vpop.permute.xlu0 %1473
        %1475 = vrot.lane.b32.xlu0 %v950, 32
        %v1476 = vpop.permute.xlu0 %1475
        %v1478 = vsel %vm974, %v1474, 0
        %v1481 = vsel %vm974, %v1476, 0
        %1483 = vmatprep.subr.bf16.mxu0 0
        %1484 = vmatpush1.bf16.xpose.msra.mxu0 %v1481
        %1485 = vmatprep.subr.bf16.mxu0 0
        %1486 = vmatpush1.bf16.xpose.msra.mxu0 0
        %1487 = vmatprep.subr.bf16.mxu0 0
        %1488 = vmatpush1.bf16.xpose.msra.mxu0 0
        %1489 = vmatprep.subr.bf16.mxu0 0
        %1490 = vmatpush1.bf16.xpose.msra.mxu0 0
        %1491 = vmatprep.subr.bf16.mxu0 0
        %1492 = vmatpush1.bf16.xpose.msra.mxu0 0
        %1493 = vmatprep.subr.bf16.mxu0 0
        %1494 = vmatpush1.bf16.xpose.msra.mxu0 0
        %1495 = vmatprep.subr.bf16.mxu0 0
        %1496 = vmatpush1.bf16.xpose.msra.mxu0 0
        %1497 = vmatprep.subr.bf16.mxu0 0
        %1498 = vmatpush1.bf16.xpose.msra.mxu0 0
        %1499 = vmatprep.subr.bf16.mxu0 0
        %1500 = vmatpush1.bf16.xpose.msra.mxu0 0
        %1501 = vmatprep.subr.bf16.mxu0 0
        %1502 = vmatpush1.bf16.xpose.msra.mxu0 0
        %1503 = vmatprep.subr.bf16.mxu0 0
        %1504 = vmatpush1.bf16.xpose.msra.mxu0 0
        %1505 = vmatprep.subr.bf16.mxu0 0
        %1506 = vmatpush1.bf16.xpose.msra.mxu0 0
        %1507 = vmatprep.subr.bf16.mxu0 0
        %1508 = vmatpush1.bf16.xpose.msra.mxu0 0
        %1509 = vmatprep.subr.bf16.mxu0 0
        %1510 = vmatpush1.bf16.xpose.msra.mxu0 0
        %1511 = vmatprep.subr.bf16.mxu0 0
        %1512 = vmatpush1.bf16.xpose.msra.mxu0 0
        %1513 = vmatprep.subr.bf16.mxu0 0
        %1514 = vmatpush1.bf16.xpose.msra.mxu0 0
        %1515 = vmatprep.mubr.bf16.mxu0 0
        %1516 = vmatmul.mubr.bf16.gmra.mrb[0].mxu0 %v1478
        %v1517 = vpop.f32.mrb[0].mxu0
        %v1518 = vadd.f32 %v957, %v1517
        %v1519 = vpop.f32.mrb[0].mxu0
        %v1520 = vpop.f32.mrb[0].mxu0
        %v1521 = vpop.f32.mrb[0].mxu0
        %1522 = vdwg.mxu0
        %v1523 = vsel %vm1021, %v1518, -inf
        %1524 = vmax.xlane.f32.xlu0 %v1523
        %v1525 = vpop.xlane.xlu0 %1524
        %v1526 = vsub.f32 %v1518, %v1525
        %v1527 = vmul.f32 %v1526, 1.442695
        %v1528 = vpow.pop %v1527
        %v1529 = vsel %vm1021, %v1528, 0.0
        %1530 = vadd.xlane.f32.xlu0 %v1529
        %v1531 = vpop.xlane.xlu0 %1530
        %v1532 = vrcp.pop %v1531
        %v1533 = vmul.f32 %v1528, %v1532
        %v1534 = vpack.c.bf16 %v1533, %v1533
        %1535 = vrot.lane.b32.xlu0 %v951, 32
        %v1536 = vpop.permute.xlu0 %1535
        %v1538 = vsel %vm1021, %v1534, 0
        %v1541 = vsel %vm1037, %v1536, 0
        %1543 = vmatprep.subr.bf16.mxu0 0
        %1544 = vmatpush1.bf16.msra.mxu0 %v1541
        %1545 = vmatprep.subr.bf16.mxu0 0
        %1546 = vmatpush1.bf16.msra.mxu0 0
        %1547 = vmatprep.subr.bf16.mxu0 0
        %1548 = vmatpush1.bf16.msra.mxu0 0
        %1549 = vmatprep.subr.bf16.mxu0 0
        %1550 = vmatpush1.bf16.msra.mxu0 0
        %1551 = vmatprep.subr.bf16.mxu0 0
        %1552 = vmatpush1.bf16.msra.mxu0 0
        %1553 = vmatprep.subr.bf16.mxu0 0
        %1554 = vmatpush1.bf16.msra.mxu0 0
        %1555 = vmatprep.subr.bf16.mxu0 0
        %1556 = vmatpush1.bf16.msra.mxu0 0
        %1557 = vmatprep.subr.bf16.mxu0 0
        %1558 = vmatpush1.bf16.msra.mxu0 0
        %1559 = vmatprep.subr.bf16.mxu0 0
        %1560 = vmatpush1.bf16.msra.mxu0 0
        %1561 = vmatprep.subr.bf16.mxu0 0
        %1562 = vmatpush1.bf16.msra.mxu0 0
        %1563 = vmatprep.subr.bf16.mxu0 0
        %1564 = vmatpush1.bf16.msra.mxu0 0
        %1565 = vmatprep.subr.bf16.mxu0 0
        %1566 = vmatpush1.bf16.msra.mxu0 0
        %1567 = vmatprep.subr.bf16.mxu0 0
        %1568 = vmatpush1.bf16.msra.mxu0 0
        %1569 = vmatprep.subr.bf16.mxu0 0
        %1570 = vmatpush1.bf16.msra.mxu0 0
        %1571 = vmatprep.subr.bf16.mxu0 0
        %1572 = vmatpush1.bf16.msra.mxu0 0
        %1573 = vmatprep.subr.bf16.mxu0 0
        %1574 = vmatpush1.bf16.msra.mxu0 0
        %1575 = vmatprep.mubr.bf16.mxu0 0
        %1576 = vmatmul.mubr.bf16.gmra.mrb[0].mxu0 %v1538
        %v1577 = vpop.f32.mrb[0].mxu0
        %v1578 = vadd.f32 0.0, %v1577
        %v1579 = vpop.f32.mrb[0].mxu0
        %v1580 = vpop.f32.mrb[0].mxu0
        %v1581 = vpop.f32.mrb[0].mxu0
        %1582 = vdwg.mxu0
        %v1583 = vpack.c.bf16 %v1578, %v1578
        %v1588 = vunpack.c.l.b16 %v970
        %v1589 = vunpack.c.l.b16 %v971
        %v1590 = vunpack.c.l.b16 %v972
        %v1591 = vunpack.c.l.b16 %v973
        %v1592 = vpack.c.b16 %v1589, %v1588
        %v1593 = vpack.c.b16 %v1591, %v1590
        %v1597 = vsel %vm974, %v1583, 0
        %1599 = vmatprep.subr.bf16.mxu0 0
        %1600 = vmatpush1.bf16.msra.mxu0 %v1592
        %1601 = vmatprep.subr.bf16.mxu0 0
        %1602 = vmatpush1.bf16.msra.mxu0 %v1593
        %1603 = vmatprep.subr.bf16.mxu0 0
        %1604 = vmatpush1.bf16.msra.mxu0 0
        %1605 = vmatprep.subr.bf16.mxu0 0
        %1606 = vmatpush1.bf16.msra.mxu0 0
        %1607 = vmatprep.subr.bf16.mxu0 0
        %1608 = vmatpush1.bf16.msra.mxu0 0
        %1609 = vmatprep.subr.bf16.mxu0 0
        %1610 = vmatpush1.bf16.msra.mxu0 0
        %1611 = vmatprep.subr.bf16.mxu0 0
        %1612 = vmatpush1.bf16.msra.mxu0 0
        %1613 = vmatprep.subr.bf16.mxu0 0
        %1614 = vmatpush1.bf16.msra.mxu0 0
        %1615 = vmatprep.subr.bf16.mxu0 0
        %1616 = vmatpush1.bf16.msra.mxu0 0
        %1617 = vmatprep.subr.bf16.mxu0 0
        %1618 = vmatpush1.bf16.msra.mxu0 0
        %1619 = vmatprep.subr.bf16.mxu0 0
        %1620 = vmatpush1.bf16.msra.mxu0 0
        %1621 = vmatprep.subr.bf16.mxu0 0
        %1622 = vmatpush1.bf16.msra.mxu0 0
        %1623 = vmatprep.subr.bf16.mxu0 0
        %1624 = vmatpush1.bf16.msra.mxu0 0
        %1625 = vmatprep.subr.bf16.mxu0 0
        %1626 = vmatpush1.bf16.msra.mxu0 0
        %1627 = vmatprep.subr.bf16.mxu0 0
        %1628 = vmatpush1.bf16.msra.mxu0 0
        %1629 = vmatprep.subr.bf16.mxu0 0
        %1630 = vmatpush1.bf16.msra.mxu0 0
        %1631 = vmatprep.mubr.bf16.mxu0 0
        %1632 = vmatmul.mubr.bf16.gmra.mrb[0].mxu0 %v1597
        %v1633 = vpop.f32.mrb[0].mxu0
        %v1634 = vadd.f32 0.0, %v1633
        %v1635 = vpop.f32.mrb[0].mxu0
        %v1636 = vpop.f32.mrb[0].mxu0
        %v1637 = vpop.f32.mrb[0].mxu0
        %1638 = vdwg.mxu0
        %v1639 = vadd.f32 %v1472, %v1634
        %v1640 = vadd.f32 %v613, %v1639
        %v1641 = vld [vmem:[%s8] sm:$0x1]
        %v1643 = vlaneseq
        %v1644 = vshrl.u32 %v1643, 7
        %v1645 = vsub.s32 0, %v1644
        %v1646 = vrot.slane %v1641, %v1645
        %v1648 = vadd.f32 %v1640, %v1646
        %v1649 = vpack.c.bf16 %v1648, %v1648
        %v1650 = vld [vmem:[#allocation11] sm:$0xff]
        %v1651 = vld [vmem:[#allocation11 + $0x8] sm:$0xff]
        %v1652 = vld [vmem:[#allocation11 + $0x10] sm:$0xff]
        %v1653 = vld [vmem:[#allocation11 + $0x18] sm:$0xff]
        %v1654 = vld [vmem:[#allocation11 + $0x20] sm:$0xff]
        %v1655 = vld [vmem:[#allocation11 + $0x28] sm:$0xff]
        %v1656 = vld [vmem:[#allocation11 + $0x30] sm:$0xff]
        %v1657 = vld [vmem:[#allocation11 + $0x38] sm:$0xff]
        %v1658 = vld [vmem:[#allocation11 + $0x40] sm:$0xff]
        %v1659 = vld [vmem:[#allocation11 + $0x48] sm:$0xff]
        %v1660 = vld [vmem:[#allocation11 + $0x50] sm:$0xff]
        %v1661 = vld [vmem:[#allocation11 + $0x58] sm:$0xff]
        %v1662 = vld [vmem:[#allocation11 + $0x60] sm:$0xff]
        %v1663 = vld [vmem:[#allocation11 + $0x68] sm:$0xff]
        %v1664 = vld [vmem:[#allocation11 + $0x70] sm:$0xff]
        %v1665 = vld [vmem:[#allocation11 + $0x78] sm:$0xff]
        %v1666 = vld [vmem:[%s10] sm:$0x3]
        %v1668 = vlaneseq
        %v1669 = vshrl.u32 %v1668, 7
        %v1670 = vsub.s32 0, %v1669
        %v1671 = vrot.slane %v1666, %v1670
        %v1672 = vlaneseq
        %v1673 = vshrl.u32 %v1672, 7
        %v1674 = vsub.s32 1, %v1673
        %v1675 = vrot.slane %v1666, %v1674
        %v1694 = vunpack.c.l.b16 %v1650
        %v1695 = vunpack.c.h.b16 %v1650
        %v1696 = vunpack.c.l.b16 %v1651
        %v1697 = vunpack.c.h.b16 %v1651
        %v1698 = vunpack.c.l.b16 %v1652
        %v1699 = vunpack.c.h.b16 %v1652
        %v1700 = vunpack.c.l.b16 %v1653
        %v1701 = vunpack.c.h.b16 %v1653
        %v1702 = vunpack.c.l.b16 %v1654
        %v1703 = vunpack.c.h.b16 %v1654
        %v1704 = vunpack.c.l.b16 %v1655
        %v1705 = vunpack.c.h.b16 %v1655
        %v1706 = vunpack.c.l.b16 %v1656
        %v1707 = vunpack.c.h.b16 %v1656
        %v1708 = vunpack.c.l.b16 %v1657
        %v1709 = vunpack.c.h.b16 %v1657
        %v1710 = vunpack.c.l.b16 %v1658
        %v1711 = vunpack.c.h.b16 %v1658
        %v1712 = vunpack.c.l.b16 %v1659
        %v1713 = vunpack.c.h.b16 %v1659
        %v1714 = vunpack.c.l.b16 %v1660
        %v1715 = vunpack.c.h.b16 %v1660
        %v1716 = vunpack.c.l.b16 %v1661
        %v1717 = vunpack.c.h.b16 %v1661
        %v1718 = vunpack.c.l.b16 %v1662
        %v1719 = vunpack.c.h.b16 %v1662
        %v1720 = vunpack.c.l.b16 %v1663
        %v1721 = vunpack.c.h.b16 %v1663
        %v1722 = vunpack.c.l.b16 %v1664
        %v1723 = vunpack.c.h.b16 %v1664
        %v1724 = vunpack.c.l.b16 %v1665
        %v1725 = vunpack.c.h.b16 %v1665
        %v1726 = vpack.c.b16 %v1696, %v1694
        %v1727 = vpack.c.b16 %v1697, %v1695
        %v1728 = vpack.c.b16 %v1700, %v1698
        %v1729 = vpack.c.b16 %v1701, %v1699
        %v1730 = vpack.c.b16 %v1704, %v1702
        %v1731 = vpack.c.b16 %v1705, %v1703
        %v1732 = vpack.c.b16 %v1708, %v1706
        %v1733 = vpack.c.b16 %v1709, %v1707
        %v1734 = vpack.c.b16 %v1712, %v1710
        %v1735 = vpack.c.b16 %v1713, %v1711
        %v1736 = vpack.c.b16 %v1716, %v1714
        %v1737 = vpack.c.b16 %v1717, %v1715
        %v1738 = vpack.c.b16 %v1720, %v1718
        %v1739 = vpack.c.b16 %v1721, %v1719
        %v1740 = vpack.c.b16 %v1724, %v1722
        %v1741 = vpack.c.b16 %v1725, %v1723
        %1758 = vmatprep.subr.bf16.mxu0 %v1727
        %1759 = vmatpush1.bf16.msra.mxu0 %v1726
        %1760 = vmatprep.subr.bf16.mxu0 %v1729
        %1761 = vmatpush1.bf16.msra.mxu0 %v1728
        %1762 = vmatprep.subr.bf16.mxu0 %v1731
        %1763 = vmatpush1.bf16.msra.mxu0 %v1730
        %1764 = vmatprep.subr.bf16.mxu0 %v1733
        %1765 = vmatpush1.bf16.msra.mxu0 %v1732
        %1766 = vmatprep.subr.bf16.mxu0 %v1735
        %1767 = vmatpush1.bf16.msra.mxu0 %v1734
        %1768 = vmatprep.subr.bf16.mxu0 %v1737
        %1769 = vmatpush1.bf16.msra.mxu0 %v1736
        %1770 = vmatprep.subr.bf16.mxu0 %v1739
        %1771 = vmatpush1.bf16.msra.mxu0 %v1738
        %1772 = vmatprep.subr.bf16.mxu0 %v1741
        %1773 = vmatpush1.bf16.msra.mxu0 %v1740
        %1774 = vmatprep.subr.bf16.mxu0 0
        %1775 = vmatpush1.bf16.msra.mxu0 0
        %1776 = vmatprep.subr.bf16.mxu0 0
        %1777 = vmatpush1.bf16.msra.mxu0 0
        %1778 = vmatprep.subr.bf16.mxu0 0
        %1779 = vmatpush1.bf16.msra.mxu0 0
        %1780 = vmatprep.subr.bf16.mxu0 0
        %1781 = vmatpush1.bf16.msra.mxu0 0
        %1782 = vmatprep.subr.bf16.mxu0 0
        %1783 = vmatpush1.bf16.msra.mxu0 0
        %1784 = vmatprep.subr.bf16.mxu0 0
        %1785 = vmatpush1.bf16.msra.mxu0 0
        %1786 = vmatprep.subr.bf16.mxu0 0
        %1787 = vmatpush1.bf16.msra.mxu0 0
        %1788 = vmatprep.subr.bf16.mxu0 0
        %1789 = vmatpush1.bf16.msra.mxu0 0
        %1790 = vmatprep.mubr.bf16.mxu0 0
        %1791 = vmatmul.mubr.bf16.gmra.mrb[0].mxu0 %v1649
        %v1792 = vpop.f32.mrb[0].mxu0
        %v1793 = vadd.f32 %v1671, %v1792
        %v1794 = vpop.f32.mrb[0].mxu0
        %v1795 = vadd.f32 %v1675, %v1794
        %v1796 = vpop.f32.mrb[0].mxu0
        %v1797 = vpop.f32.mrb[0].mxu0
        %1798 = vdwg.mxu0
        %v1799 = vmul.f32 %v1793, 0.5
        %v1800 = vmul.f32 %v1795, 0.5
        %v1801 = vrcp.pop 1.4142135
        %v1802 = vmul.f32 %v1793, %v1801
        %v1803 = vmul.f32 %v1795, %v1801
        %v1804 = verf.f32.pop %v1802
        %v1805 = verf.f32.pop %v1803
        %v1806 = vadd.f32 %v1804, 1.0
        %v1807 = vadd.f32 %v1805, 1.0
        %v1808 = vmul.f32 %v1799, %v1806
        %v1809 = vmul.f32 %v1800, %v1807
        %v1810 = vpack.c.bf16 %v1808, %v1808
        %v1811 = vpack.c.bf16 %v1809, %v1809
        %v1812 = vld [vmem:[#allocation13] sm:$0xff]
        %v1813 = vld [vmem:[#allocation13 + $0x8] sm:$0xff]
        %v1814 = vld [vmem:[#allocation13 + $0x10] sm:$0xff]
        %v1815 = vld [vmem:[#allocation13 + $0x18] sm:$0xff]
        %v1816 = vld [vmem:[#allocation13 + $0x20] sm:$0xff]
        %v1817 = vld [vmem:[#allocation13 + $0x28] sm:$0xff]
        %v1818 = vld [vmem:[#allocation13 + $0x30] sm:$0xff]
        %v1819 = vld [vmem:[#allocation13 + $0x38] sm:$0xff]
        %v1820 = vld [vmem:[#allocation13 + $0x40] sm:$0xff]
        %v1821 = vld [vmem:[#allocation13 + $0x48] sm:$0xff]
        %v1822 = vld [vmem:[#allocation13 + $0x50] sm:$0xff]
        %v1823 = vld [vmem:[#allocation13 + $0x58] sm:$0xff]
        %v1824 = vld [vmem:[#allocation13 + $0x60] sm:$0xff]
        %v1825 = vld [vmem:[#allocation13 + $0x68] sm:$0xff]
        %v1826 = vld [vmem:[#allocation13 + $0x70] sm:$0xff]
        %v1827 = vld [vmem:[#allocation13 + $0x78] sm:$0xff]
        %v1828 = vld [vmem:[#allocation13 + $0x80] sm:$0xff]
        %v1829 = vld [vmem:[#allocation13 + $0x88] sm:$0xff]
        %v1830 = vld [vmem:[#allocation13 + $0x90] sm:$0xff]
        %v1831 = vld [vmem:[#allocation13 + $0x98] sm:$0xff]
        %v1832 = vld [vmem:[#allocation13 + $0xa0] sm:$0xff]
        %v1833 = vld [vmem:[#allocation13 + $0xa8] sm:$0xff]
        %v1834 = vld [vmem:[#allocation13 + $0xb0] sm:$0xff]
        %v1835 = vld [vmem:[#allocation13 + $0xb8] sm:$0xff]
        %v1836 = vld [vmem:[#allocation13 + $0xc0] sm:$0xff]
        %v1837 = vld [vmem:[#allocation13 + $0xc8] sm:$0xff]
        %v1838 = vld [vmem:[#allocation13 + $0xd0] sm:$0xff]
        %v1839 = vld [vmem:[#allocation13 + $0xd8] sm:$0xff]
        %v1840 = vld [vmem:[#allocation13 + $0xe0] sm:$0xff]
        %v1841 = vld [vmem:[#allocation13 + $0xe8] sm:$0xff]
        %v1842 = vld [vmem:[#allocation13 + $0xf0] sm:$0xff]
        %v1843 = vld [vmem:[#allocation13 + $0xf8] sm:$0xff]
        %v1844 = vld [vmem:[%s12] sm:$0x3]
        %v1846 = vlaneseq
        %v1847 = vshrl.u32 %v1846, 7
        %v1848 = vsub.s32 0, %v1847
        %v1849 = vrot.slane %v1844, %v1848
        %v1850 = vlaneseq
        %v1851 = vshrl.u32 %v1850, 7
        %v1852 = vsub.s32 1, %v1851
        %v1853 = vrot.slane %v1844, %v1852
        %v1888 = vunpack.c.l.b16 %v1812
        %v1889 = vunpack.c.h.b16 %v1812
        %v1890 = vunpack.c.l.b16 %v1813
        %v1891 = vunpack.c.h.b16 %v1813
        %v1892 = vunpack.c.l.b16 %v1814
        %v1893 = vunpack.c.h.b16 %v1814
        %v1894 = vunpack.c.l.b16 %v1815
        %v1895 = vunpack.c.h.b16 %v1815
        %v1896 = vunpack.c.l.b16 %v1816
        %v1897 = vunpack.c.h.b16 %v1816
        %v1898 = vunpack.c.l.b16 %v1817
        %v1899 = vunpack.c.h.b16 %v1817
        %v1900 = vunpack.c.l.b16 %v1818
        %v1901 = vunpack.c.h.b16 %v1818
        %v1902 = vunpack.c.l.b16 %v1819
        %v1903 = vunpack.c.h.b16 %v1819
        %v1904 = vunpack.c.l.b16 %v1820
        %v1905 = vunpack.c.h.b16 %v1820
        %v1906 = vunpack.c.l.b16 %v1821
        %v1907 = vunpack.c.h.b16 %v1821
        %v1908 = vunpack.c.l.b16 %v1822
        %v1909 = vunpack.c.h.b16 %v1822
        %v1910 = vunpack.c.l.b16 %v1823
        %v1911 = vunpack.c.h.b16 %v1823
        %v1912 = vunpack.c.l.b16 %v1824
        %v1913 = vunpack.c.h.b16 %v1824
        %v1914 = vunpack.c.l.b16 %v1825
        %v1915 = vunpack.c.h.b16 %v1825
        %v1916 = vunpack.c.l.b16 %v1826
        %v1917 = vunpack.c.h.b16 %v1826
        %v1918 = vunpack.c.l.b16 %v1827
        %v1919 = vunpack.c.h.b16 %v1827
        %v1920 = vunpack.c.l.b16 %v1828
        %v1921 = vunpack.c.h.b16 %v1828
        %v1922 = vunpack.c.l.b16 %v1829
        %v1923 = vunpack.c.h.b16 %v1829
        %v1924 = vunpack.c.l.b16 %v1830
        %v1925 = vunpack.c.h.b16 %v1830
        %v1926 = vunpack.c.l.b16 %v1831
        %v1927 = vunpack.c.h.b16 %v1831
        %v1928 = vunpack.c.l.b16 %v1832
        %v1929 = vunpack.c.h.b16 %v1832
        %v1930 = vunpack.c.l.b16 %v1833
        %v1931 = vunpack.c.h.b16 %v1833
        %v1932 = vunpack.c.l.b16 %v1834
        %v1933 = vunpack.c.h.b16 %v1834
        %v1934 = vunpack.c.l.b16 %v1835
        %v1935 = vunpack.c.h.b16 %v1835
        %v1936 = vunpack.c.l.b16 %v1836
        %v1937 = vunpack.c.h.b16 %v1836
        %v1938 = vunpack.c.l.b16 %v1837
        %v1939 = vunpack.c.h.b16 %v1837
        %v1940 = vunpack.c.l.b16 %v1838
        %v1941 = vunpack.c.h.b16 %v1838
        %v1942 = vunpack.c.l.b16 %v1839
        %v1943 = vunpack.c.h.b16 %v1839
        %v1944 = vunpack.c.l.b16 %v1840
        %v1945 = vunpack.c.h.b16 %v1840
        %v1946 = vunpack.c.l.b16 %v1841
        %v1947 = vunpack.c.h.b16 %v1841
        %v1948 = vunpack.c.l.b16 %v1842
        %v1949 = vunpack.c.h.b16 %v1842
        %v1950 = vunpack.c.l.b16 %v1843
        %v1951 = vunpack.c.h.b16 %v1843
        %v1952 = vpack.c.b16 %v1890, %v1888
        %v1953 = vpack.c.b16 %v1891, %v1889
        %v1954 = vpack.c.b16 %v1894, %v1892
        %v1955 = vpack.c.b16 %v1895, %v1893
        %v1956 = vpack.c.b16 %v1898, %v1896
        %v1957 = vpack.c.b16 %v1899, %v1897
        %v1958 = vpack.c.b16 %v1902, %v1900
        %v1959 = vpack.c.b16 %v1903, %v1901
        %v1960 = vpack.c.b16 %v1906, %v1904
        %v1961 = vpack.c.b16 %v1907, %v1905
        %v1962 = vpack.c.b16 %v1910, %v1908
        %v1963 = vpack.c.b16 %v1911, %v1909
        %v1964 = vpack.c.b16 %v1914, %v1912
        %v1965 = vpack.c.b16 %v1915, %v1913
        %v1966 = vpack.c.b16 %v1918, %v1916
        %v1967 = vpack.c.b16 %v1919, %v1917
        %v1968 = vpack.c.b16 %v1922, %v1920
        %v1969 = vpack.c.b16 %v1923, %v1921
        %v1970 = vpack.c.b16 %v1926, %v1924
        %v1971 = vpack.c.b16 %v1927, %v1925
        %v1972 = vpack.c.b16 %v1930, %v1928
        %v1973 = vpack.c.b16 %v1931, %v1929
        %v1974 = vpack.c.b16 %v1934, %v1932
        %v1975 = vpack.c.b16 %v1935, %v1933
        %v1976 = vpack.c.b16 %v1938, %v1936
        %v1977 = vpack.c.b16 %v1939, %v1937
        %v1978 = vpack.c.b16 %v1942, %v1940
        %v1979 = vpack.c.b16 %v1943, %v1941
        %v1980 = vpack.c.b16 %v1946, %v1944
        %v1981 = vpack.c.b16 %v1947, %v1945
        %v1982 = vpack.c.b16 %v1950, %v1948
        %v1983 = vpack.c.b16 %v1951, %v1949
        %2016 = vmatprep.subr.bf16.mxu0 %v1953
        %2017 = vmatpush1.bf16.msra.mxu0 %v1952
        %2018 = vmatprep.subr.bf16.mxu0 %v1955
        %2019 = vmatpush1.bf16.msra.mxu0 %v1954
        %2020 = vmatprep.subr.bf16.mxu0 %v1957
        %2021 = vmatpush1.bf16.msra.mxu0 %v1956
        %2022 = vmatprep.subr.bf16.mxu0 %v1959
        %2023 = vmatpush1.bf16.msra.mxu0 %v1958
        %2024 = vmatprep.subr.bf16.mxu0 %v1961
        %2025 = vmatpush1.bf16.msra.mxu0 %v1960
        %2026 = vmatprep.subr.bf16.mxu0 %v1963
        %2027 = vmatpush1.bf16.msra.mxu0 %v1962
        %2028 = vmatprep.subr.bf16.mxu0 %v1965
        %2029 = vmatpush1.bf16.msra.mxu0 %v1964
        %2030 = vmatprep.subr.bf16.mxu0 %v1967
        %2031 = vmatpush1.bf16.msra.mxu0 %v1966
        %2032 = vmatprep.subr.bf16.mxu0 %v1969
        %2033 = vmatpush1.bf16.msra.mxu0 %v1968
        %2034 = vmatprep.subr.bf16.mxu0 %v1971
        %2035 = vmatpush1.bf16.msra.mxu0 %v1970
        %2036 = vmatprep.subr.bf16.mxu0 %v1973
        %2037 = vmatpush1.bf16.msra.mxu0 %v1972
        %2038 = vmatprep.subr.bf16.mxu0 %v1975
        %2039 = vmatpush1.bf16.msra.mxu0 %v1974
        %2040 = vmatprep.subr.bf16.mxu0 %v1977
        %2041 = vmatpush1.bf16.msra.mxu0 %v1976
        %2042 = vmatprep.subr.bf16.mxu0 %v1979
        %2043 = vmatpush1.bf16.msra.mxu0 %v1978
        %2044 = vmatprep.subr.bf16.mxu0 %v1981
        %2045 = vmatpush1.bf16.msra.mxu0 %v1980
        %2046 = vmatprep.subr.bf16.mxu0 %v1983
        %2047 = vmatpush1.bf16.msra.mxu0 %v1982
        %2048 = vmatprep.mubr.bf16.mxu0 %v1811
        %2049 = vmatmul.mubr.bf16.gmra.mrb[0].mxu0 %v1810
        %v2050 = vpop.f32.mrb[0].mxu0
        %v2051 = vadd.f32 %v1849, %v2050
        %v2052 = vpop.f32.mrb[0].mxu0
        %v2053 = vadd.f32 %v1853, %v2052
        %v2054 = vpop.f32.mrb[0].mxu0
        %v2055 = vpop.f32.mrb[0].mxu0
        %2056 = vdwg.mxu0
        %v2057 = vmul.f32 %v2051, 0.5
        %v2058 = vmul.f32 %v2053, 0.5
        %v2059 = vmul.f32 %v2051, %v1801
        %v2060 = vmul.f32 %v2053, %v1801
        %v2061 = verf.f32.pop %v2059
        %v2062 = verf.f32.pop %v2060
        %v2063 = vadd.f32 %v2061, 1.0
        %v2064 = vadd.f32 %v2062, 1.0
        %v2065 = vmul.f32 %v2057, %v2063
        %v2066 = vmul.f32 %v2058, %v2064
        %v2067 = vpack.c.bf16 %v2065, %v2065
        %v2068 = vpack.c.bf16 %v2066, %v2066
        %v2069 = vld [vmem:[#allocation14] sm:$0xf]
        %v2070 = vld [vmem:[#allocation14 + $0x4] sm:$0xf]
        %v2071 = vld [vmem:[#allocation14 + $0x8] sm:$0xf]
        %v2072 = vld [vmem:[#allocation14 + $0xc] sm:$0xf]
        %v2073 = vld [vmem:[#allocation14 + $0x10] sm:$0xf]
        %v2074 = vld [vmem:[#allocation14 + $0x14] sm:$0xf]
        %v2075 = vld [vmem:[#allocation14 + $0x18] sm:$0xf]
        %v2076 = vld [vmem:[#allocation14 + $0x1c] sm:$0xf]
        %v2077 = vld [vmem:[#allocation14 + $0x20] sm:$0xf]
        %v2078 = vld [vmem:[#allocation14 + $0x24] sm:$0xf]
        %v2079 = vld [vmem:[#allocation14 + $0x28] sm:$0xf]
        %v2080 = vld [vmem:[#allocation14 + $0x2c] sm:$0xf]
        %v2081 = vld [vmem:[#allocation14 + $0x30] sm:$0xf]
        %v2082 = vld [vmem:[#allocation14 + $0x34] sm:$0xf]
        %v2083 = vld [vmem:[#allocation14 + $0x38] sm:$0xf]
        %v2084 = vld [vmem:[#allocation14 + $0x3c] sm:$0xf]
        %v2085 = vld [vmem:[#allocation14 + $0x40] sm:$0xf]
        %v2086 = vld [vmem:[#allocation14 + $0x44] sm:$0xf]
        %v2087 = vld [vmem:[#allocation14 + $0x48] sm:$0xf]
        %v2088 = vld [vmem:[#allocation14 + $0x4c] sm:$0xf]
        %v2089 = vld [vmem:[#allocation14 + $0x50] sm:$0xf]
        %v2090 = vld [vmem:[#allocation14 + $0x54] sm:$0xf]
        %v2091 = vld [vmem:[#allocation14 + $0x58] sm:$0xf]
        %v2092 = vld [vmem:[#allocation14 + $0x5c] sm:$0xf]
        %v2093 = vld [vmem:[#allocation14 + $0x60] sm:$0xf]
        %v2094 = vld [vmem:[#allocation14 + $0x64] sm:$0xf]
        %v2095 = vld [vmem:[#allocation14 + $0x68] sm:$0xf]
        %v2096 = vld [vmem:[#allocation14 + $0x6c] sm:$0xf]
        %v2097 = vld [vmem:[#allocation14 + $0x70] sm:$0xf]
        %v2098 = vld [vmem:[#allocation14 + $0x74] sm:$0xf]
        %v2099 = vld [vmem:[#allocation14 + $0x78] sm:$0xf]
        %v2100 = vld [vmem:[#allocation14 + $0x7c] sm:$0xf]
        %v2101 = vld [vmem:[%s14] sm:$0x1]
        %v2103 = vlaneseq
        %v2104 = vshrl.u32 %v2103, 7
        %v2105 = vsub.s32 0, %v2104
        %v2106 = vrot.slane %v2101, %v2105
        %v2140 = vunpack.c.l.b16 %v2069
        %v2141 = vunpack.c.l.b16 %v2070
        %v2142 = vunpack.c.l.b16 %v2071
        %v2143 = vunpack.c.l.b16 %v2072
        %v2144 = vunpack.c.l.b16 %v2073
        %v2145 = vunpack.c.l.b16 %v2074
        %v2146 = vunpack.c.l.b16 %v2075
        %v2147 = vunpack.c.l.b16 %v2076
        %v2148 = vunpack.c.l.b16 %v2077
        %v2149 = vunpack.c.l.b16 %v2078
        %v2150 = vunpack.c.l.b16 %v2079
        %v2151 = vunpack.c.l.b16 %v2080
        %v2152 = vunpack.c.l.b16 %v2081
        %v2153 = vunpack.c.l.b16 %v2082
        %v2154 = vunpack.c.l.b16 %v2083
        %v2155 = vunpack.c.l.b16 %v2084
        %v2156 = vunpack.c.l.b16 %v2085
        %v2157 = vunpack.c.l.b16 %v2086
        %v2158 = vunpack.c.l.b16 %v2087
        %v2159 = vunpack.c.l.b16 %v2088
        %v2160 = vunpack.c.l.b16 %v2089
        %v2161 = vunpack.c.l.b16 %v2090
        %v2162 = vunpack.c.l.b16 %v2091
        %v2163 = vunpack.c.l.b16 %v2092
        %v2164 = vunpack.c.l.b16 %v2093
        %v2165 = vunpack.c.l.b16 %v2094
        %v2166 = vunpack.c.l.b16 %v2095
        %v2167 = vunpack.c.l.b16 %v2096
        %v2168 = vunpack.c.l.b16 %v2097
        %v2169 = vunpack.c.l.b16 %v2098
        %v2170 = vunpack.c.l.b16 %v2099
        %v2171 = vunpack.c.l.b16 %v2100
        %v2172 = vpack.c.b16 %v2141, %v2140
        %v2173 = vpack.c.b16 %v2143, %v2142
        %v2174 = vpack.c.b16 %v2145, %v2144
        %v2175 = vpack.c.b16 %v2147, %v2146
        %v2176 = vpack.c.b16 %v2149, %v2148
        %v2177 = vpack.c.b16 %v2151, %v2150
        %v2178 = vpack.c.b16 %v2153, %v2152
        %v2179 = vpack.c.b16 %v2155, %v2154
        %v2180 = vpack.c.b16 %v2157, %v2156
        %v2181 = vpack.c.b16 %v2159, %v2158
        %v2182 = vpack.c.b16 %v2161, %v2160
        %v2183 = vpack.c.b16 %v2163, %v2162
        %v2184 = vpack.c.b16 %v2165, %v2164
        %v2185 = vpack.c.b16 %v2167, %v2166
        %v2186 = vpack.c.b16 %v2169, %v2168
        %v2187 = vpack.c.b16 %v2171, %v2170
        %2204 = vmatprep.subr.bf16.mxu0 0
        %2205 = vmatpush1.bf16.msra.mxu0 %v2172
        %2206 = vmatprep.subr.bf16.mxu0 0
        %2207 = vmatpush1.bf16.msra.mxu0 %v2173
        %2208 = vmatprep.subr.bf16.mxu0 0
        %2209 = vmatpush1.bf16.msra.mxu0 %v2174
        %2210 = vmatprep.subr.bf16.mxu0 0
        %2211 = vmatpush1.bf16.msra.mxu0 %v2175
        %2212 = vmatprep.subr.bf16.mxu0 0
        %2213 = vmatpush1.bf16.msra.mxu0 %v2176
        %2214 = vmatprep.subr.bf16.mxu0 0
        %2215 = vmatpush1.bf16.msra.mxu0 %v2177
        %2216 = vmatprep.subr.bf16.mxu0 0
        %2217 = vmatpush1.bf16.msra.mxu0 %v2178
        %2218 = vmatprep.subr.bf16.mxu0 0
        %2219 = vmatpush1.bf16.msra.mxu0 %v2179
        %2220 = vmatprep.subr.bf16.mxu0 0
        %2221 = vmatpush1.bf16.msra.mxu0 %v2180
        %2222 = vmatprep.subr.bf16.mxu0 0
        %2223 = vmatpush1.bf16.msra.mxu0 %v2181
        %2224 = vmatprep.subr.bf16.mxu0 0
        %2225 = vmatpush1.bf16.msra.mxu0 %v2182
        %2226 = vmatprep.subr.bf16.mxu0 0
        %2227 = vmatpush1.bf16.msra.mxu0 %v2183
        %2228 = vmatprep.subr.bf16.mxu0 0
        %2229 = vmatpush1.bf16.msra.mxu0 %v2184
        %2230 = vmatprep.subr.bf16.mxu0 0
        %2231 = vmatpush1.bf16.msra.mxu0 %v2185
        %2232 = vmatprep.subr.bf16.mxu0 0
        %2233 = vmatpush1.bf16.msra.mxu0 %v2186
        %2234 = vmatprep.subr.bf16.mxu0 0
        %2235 = vmatpush1.bf16.msra.mxu0 %v2187
        %2236 = vmatprep.mubr.bf16.mxu0 %v2068
        %2237 = vmatmul.mubr.bf16.gmra.mrb[0].mxu0 %v2067
        %v2238 = vpop.f32.mrb[0].mxu0
        %v2239 = vadd.f32 %v2106, %v2238
        %v2240 = vpop.f32.mrb[0].mxu0
        %v2241 = vpop.f32.mrb[0].mxu0
        %v2242 = vpop.f32.mrb[0].mxu0
        %2243 = vdwg.mxu0
        %2244 = vst [vmem:[%s611] sm:$0xff] %v2239
        %s2245 = sand.u32 %s364, 1
        %s2246 = scalar_lea.sflag [#allocation4], %s2245
        %s2247 = sand.u32 %s364, 1
        %s2248 = smul.addr %s2247, 8
        %s2249 = scalar_lea.vmem [#allocation16], %s2248
        // Predicated region
        $region113: #{tpu_custom_call.1} parent=79 // pred_check
          %p2250 = pneg %p374
        $region114: #{tpu_custom_call.1} parent=79 // pred_check_branch
          %2252 = sbr.rel (%p2250) target = $region116
        $region115: #{tpu_custom_call.1} parent=79 // pred_region
          %s2254 = ssub.s32 128, 128
          %2255 = vsyncadd %s2246, %s2254
          %s2256 = smul.addr %s36, 128
          %s2257 = scalar_lea.hbm %s15, %s2256
          %s2259 = sshll.u32 %s2249, 4
          %s2260 = int_to_ptr.vmem [resolvable:$true] %s2259
          %2262 = dma.vmem_to_hbm [thread:$0]  %s2260, 128, %s2257, %s2246
        $region116: #{tpu_custom_call.1} parent=79 // pred_fallthru
          _
      $region80: #{tpu_custom_call.1} parent=5 // pred_fallthru
        _
      %p2263 = scmp.le.s32.totalorder 2, %s31
      // Predicated region
      $region117: #{tpu_custom_call.1} parent=5 // pred_check
        %p2264 = pneg %p2263
      $region118: #{tpu_custom_call.1} parent=5 // pred_check_branch
        %2266 = sbr.rel (%p2264) target = $region120
      $region119: #{tpu_custom_call.1} parent=5 // pred_region
        %s2267 = ssub.s32 %s31, 2
        // Predicated region
        $region121: #{tpu_custom_call.1} parent=119 // pred_check
          %p2268 = pneg %p380
        $region122: #{tpu_custom_call.1} parent=119 // pred_check_branch
          %2270 = sbr.rel (%p2268) target = $region124
        $region123: #{tpu_custom_call.1} parent=119 // pred_region
          %s2271 = sand.u32 %s365, 1
          %s2272 = scalar_lea.sflag [#allocation4], %s2271
          %s2273 = sand.u32 %s365, 1
          %s2274 = smul.addr %s2273, 8
          %s2275 = scalar_lea.vmem [#allocation16], %s2274
          %2276 = dma.done %s2272, 128
        $region124: #{tpu_custom_call.1} parent=119 // pred_fallthru
          _
      $region120: #{tpu_custom_call.1} parent=5 // pred_fallthru
        _
    $region6: #{tpu_custom_call.1} parent=1 // loop_footer
      %s35 = sadd.s32 1, %s31
    $region7: #{tpu_custom_call.1} parent=1 // loop_footer_branch
      %30 = sbr.rel target = $region3
    $region8: #{tpu_custom_call.1} parent=1 // loop_exit
      _
    %2277 = vsyncpa [#allocation3], 1
    %s2278 = scalar_lea.sflag [#allocation3], 1
    %2279 = vsyncpa %s2278, 1
    %2280 = vsyncpa [#allocation6], 1
    %2281 = vsyncpa [#allocation9], 1
    %2282 = vsyncpa [#allocation12], 1
    %2283 = vsyncpa [#allocation15], 1
    %2284 = vsyncpa [#allocation4], 1
    %s2285 = scalar_lea.sflag [#allocation4], 1
    %2286 = vsyncpa %s2285, 1

</llo_original>
